<compile_context>
chip_gen: v6e
topology: v6e:2x2x1
jax: 0.10.0
libtpu: 0.0.40
codegen_flags: <defaults>
</compile_context>

<pallas_src>
import functools

import jax
import jax.numpy as jnp
from jax.experimental import pallas as pl
from jax.experimental.pallas import tpu as pltpu

LAST_CHN = 256        # last_chn_dict['SleePyCo']
PROJ_DIM = 128        # config['proj_head']['dim']
EPS = 1e-12           # F.normalize default eps
LANE = 128            # vreg lane width
MAX_TILE_L = 512      # time-axis (reduction) tile


def _make_head_kernel(L, tile_l, n_l):
    """Fused AdaptiveAvgPool1d(1) + Flatten + Linear + L2-normalize for one feature.

    grid = (n_b, n_l): batch blocks ("parallel") x time tiles ("arbitrary", innermost).

    feat_ref: (b_blk, C, tile_l) f32 VMEM  - one time tile of the feature
    w_ref:    (C, P)             f32 VMEM  - pre-transposed Linear weight (resident)
    b_ref:    (1, P)             f32 VMEM  - bias (resident)
    out_ref:  (1, b_blk, P)      f32 VMEM  - written only on the last time tile
    acc_ref:  (b_blk, C, LANE)   f32 VMEM scratch - lane-deferred running sum over L
    """
    groups = tile_l // LANE
    ragged = (L % tile_l) != 0

    def kernel(feat_ref, w_ref, b_ref, out_ref, acc_ref):
        k = pl.program_id(1)

        @pl.when(k == 0)
        def _():
            acc_ref[...] = jnp.zeros_like(acc_ref)

        x = feat_ref[...]                                        # (b_blk, C, tile_l)
        if ragged:
            # Zero lanes past the true length (last block's padding is undefined).
            lane_idx = jax.lax.broadcasted_iota(jnp.int32, x.shape, 2)
            x = jnp.where(lane_idx < (L - k * tile_l), x, 0.0)

        # Fold the tile's lane groups with pure VPU adds (no per-step XLU reduce).
        partial = x[:, :, 0:LANE]
        for g in range(1, groups):
            partial = partial + x[:, :, g * LANE:(g + 1) * LANE]
        acc_ref[...] += partial

        @pl.when(k == n_l - 1)
        def _():
            # AdaptiveAvgPool1d(1): one cross-lane reduce + divide by the true length.
            pooled = jnp.sum(acc_ref[...], axis=-1) * (1.0 / float(L))   # (b_blk, C)
            # Linear: pooled @ W^T + b (weight pre-transposed in the wrapper).
            y = jnp.dot(pooled, w_ref[...], preferred_element_type=jnp.float32)
            y = y + b_ref[...]                                           # (b_blk, P)
            # F.normalize: y / max(||y||, eps) == y * rsqrt(max(||y||^2, eps^2)).
            sumsq = jnp.sum(y * y, axis=1, keepdims=True)
            out_ref[0] = y * jax.lax.rsqrt(jnp.maximum(sumsq, EPS * EPS))

    return kernel


@functools.partial(jax.jit, static_argnames=("max_tile_l",))
def _proj_head_single(feature, w_t, bias2d, max_tile_l=MAX_TILE_L):
    """feature: (B, C, L) f32 (unpadded); w_t: (C, P); bias2d: (1, P) -> (B, P)."""
    B, C, L = feature.shape
    P = w_t.shape[1]
    if L <= 0:
        raise ValueError("feature length must be > 0")

    tile_l = min(max_tile_l, pl.cdiv(L, LANE) * LANE)    # lane-aligned time tile
    n_l = pl.cdiv(L, tile_l)
    n_b = 2 if (B >= 2 and B % 2 == 0) else 1            # v7x: shard batch over 2 TCs
    b_blk = B // n_b

    out = pl.pallas_call(
        _make_head_kernel(L, tile_l, n_l),
        out_shape=jax.ShapeDtypeStruct((n_b, b_blk, P), jnp.float32),
        grid=(n_b, n_l),
        in_specs=[
            pl.BlockSpec((b_blk, C, tile_l), lambda b, k: (b, 0, k)),
            pl.BlockSpec((C, P), lambda b, k: (0, 0)),       # resident weight
            pl.BlockSpec((1, P), lambda b, k: (0, 0)),       # resident bias
        ],
        out_specs=pl.BlockSpec((1, b_blk, P), lambda b, k: (b, 0, 0)),
        scratch_shapes=[pltpu.VMEM((b_blk, C, LANE), jnp.float32)],
        compiler_params=pltpu.CompilerParams(
            dimension_semantics=("parallel", "arbitrary")),
    )(feature, w_t, bias2d)
    return out.reshape(B, P)


def main_model_forward(features, weight, bias):
    """Mirrors MainModel.forward (pretrain / Linear head).

    features: list of (B, C, L_i) backbone outputs (ragged lengths allowed).
    weight:   (P, C) torch-layout Linear weight;  bias: (P,).
    Dropout(p=0.5) is identity at eval time.
    """
    # TODO(synk): SleePyCoBackbone / get_classifier / MLP-head sources not provided;
    # this consumes the backbone's feature list and implements the Linear pretrain head.
    w_t = weight.T                        # (C, P): no in-kernel transpose
    bias2d = bias.reshape(1, -1)
    return [_proj_head_single(f, w_t, bias2d) for f in features]


def _reference(features, weight, bias):
    outs = []
    for feature in features:
        pooled = jnp.mean(feature, axis=-1)
        y = jnp.dot(pooled, weight.T, precision=jax.lax.Precision.HIGHEST) + bias
        n = jnp.sqrt(jnp.sum(y * y, axis=1, keepdims=True))
        outs.append(y / jnp.maximum(n, EPS))
    return outs


if __name__ == "__main__":
    key = jax.random.PRNGKey(0)
    k_f1, k_f2, k_w, k_b = jax.random.split(key, 4)

    B, C = 4, LAST_CHN
    L1, L2 = 600, 200      # ragged, non-aligned lengths: multi-tile + masked tails
    feat1 = jax.random.normal(k_f1, (B, C, L1), dtype=jnp.float32)
    feat2 = jax.random.normal(k_f2, (B, C, L2), dtype=jnp.float32)
    features = [feat1, feat2]

    # Deterministic Linear(256 -> 128) parameters (torch layout: (out, in)).
    bound = 1.0 / jnp.sqrt(jnp.float32(C))
    weight = jax.random.uniform(k_w, (PROJ_DIM, C), jnp.float32, -bound, bound)
    bias = jax.random.uniform(k_b, (PROJ_DIM,), jnp.float32, -bound, bound)

    outs = main_model_forward(features, weight, bias)
    outs = [jax.block_until_ready(o) for o in outs]

    refs = _reference(features, weight, bias)
    for o, r in zip(outs, refs):
        assert o.shape == (B, PROJ_DIM)
        assert bool(jnp.isfinite(o).all())
        # Tolerance allows for MXU vs XLA matmul pass-precision differences only;
        # any logic error (length, mask, bias, normalize) is orders larger.
        assert jnp.allclose(o, r, atol=1e-3, rtol=1e-3), "mismatch vs reference"

    print("KERNEL_OK")
</pallas_src>

<mosaic_0001>
module attributes {stable_mosaic.version = 11 : i64} {
  func.func @kernel(%arg0: i32, %arg1: i32, %arg2: memref<2x256x512xf32, #tpu.memory_space<vmem>>, %arg3: memref<256x128xf32, #tpu.memory_space<vmem>>, %arg4: memref<1x128xf32, #tpu.memory_space<vmem>>, %arg5: memref<1x2x128xf32, #tpu.memory_space<vmem>>, %arg6: memref<2x256x128xf32, #tpu.memory_space<vmem>>) attributes {dimension_semantics = [#tpu.dimension_semantics<parallel>, #tpu.dimension_semantics<arbitrary>], iteration_bounds = array<i64: 2, 2>, scalar_prefetch = 0 : i64, scratch_operands = 1 : i64, tpu.core_type = #tpu.core_type<tc>, window_params = [{transform_indices = @transform_0, window_bounds = array<i64: 2, 256, 512>}, {pipeline_mode = #tpu.pipeline_mode<synchronous>, transform_indices = @transform_1, window_bounds = array<i64: 256, 128>}, {pipeline_mode = #tpu.pipeline_mode<synchronous>, transform_indices = @transform_2, window_bounds = array<i64: 1, 128>}, {transform_indices = @transform_3, window_bounds = array<i64: 1, 2, 128>}]} {
    %c0_i32 = arith.constant 0 : i32
    %0 = arith.cmpi eq, %arg1, %c0_i32 : i32
    %1 = arith.extui %0 : i1 to i32
    %c0_i32_0 = arith.constant 0 : i32
    %2 = arith.cmpi ne, %1, %c0_i32_0 : i32
    scf.if %2 {
      %cst_10 = arith.constant 0.000000e+00 : f32
      %24 = vector.broadcast %cst_10 : f32 to vector<2x256x128xf32>
      %c0_11 = arith.constant 0 : index
      %c0_12 = arith.constant 0 : index
      %c0_13 = arith.constant 0 : index
      %25 = vector.load %arg6[%c0_11, %c0_12, %c0_13] : memref<2x256x128xf32, #tpu.memory_space<vmem>>, vector<2x256x128xf32>
      tpu.vector_store %arg6[%c0_11, %c0_12, %c0_13], %24 {strides = array<i32>} : memref<2x256x128xf32, #tpu.memory_space<vmem>>, vector<2x256x128xf32>,
    } else {
    }
    %c0 = arith.constant 0 : index
    %c0_1 = arith.constant 0 : index
    %c0_2 = arith.constant 0 : index
    %3 = vector.load %arg2[%c0, %c0_1, %c0_2] : memref<2x256x512xf32, #tpu.memory_space<vmem>>, vector<2x256x512xf32>
    %4 = tpu.iota {dimensions = array<i32: 2>} : vector<2x256x512xi32>
    %c512_i32 = arith.constant 512 : i32
    %5 = arith.muli %arg1, %c512_i32 : i32
    %c600_i32 = arith.constant 600 : i32
    %6 = arith.subi %c600_i32, %5 : i32
    %7 = vector.broadcast %6 : i32 to vector<2x256x512xi32>
    %8 = arith.cmpi slt, %4, %7 : vector<2x256x512xi32>
    %cst = arith.constant 0.000000e+00 : f32
    %9 = vector.broadcast %cst : f32 to vector<2x256x512xf32>
    %10 = arith.select %8, %3, %9 : vector<2x256x512xi1>, vector<2x256x512xf32>
    %11 = vector.extract_strided_slice %10 {offsets = [0, 0, 0], sizes = [2, 256, 128], strides = [1, 1, 1]} : vector<2x256x512xf32> to vector<2x256x128xf32>
    %12 = vector.extract_strided_slice %10 {offsets = [0, 0, 128], sizes = [2, 256, 128], strides = [1, 1, 1]} : vector<2x256x512xf32> to vector<2x256x128xf32>
    %13 = arith.addf %11, %12 : vector<2x256x128xf32>
    %14 = vector.extract_strided_slice %10 {offsets = [0, 0, 256], sizes = [2, 256, 128], strides = [1, 1, 1]} : vector<2x256x512xf32> to vector<2x256x128xf32>
    %15 = arith.addf %13, %14 : vector<2x256x128xf32>
    %16 = vector.extract_strided_slice %10 {offsets = [0, 0, 384], sizes = [2, 256, 128], strides = [1, 1, 1]} : vector<2x256x512xf32> to vector<2x256x128xf32>
    %17 = arith.addf %15, %16 : vector<2x256x128xf32>
    %c0_3 = arith.constant 0 : index
    %c0_4 = arith.constant 0 : index
    %c0_5 = arith.constant 0 : index
    %18 = vector.load %arg6[%c0_3, %c0_4, %c0_5] : memref<2x256x128xf32, #tpu.memory_space<vmem>>, vector<2x256x128xf32>
    %19 = arith.addf %18, %17 : vector<2x256x128xf32>
    %c0_6 = arith.constant 0 : index
    %c0_7 = arith.constant 0 : index
    %c0_8 = arith.constant 0 : index
    %20 = vector.load %arg6[%c0_6, %c0_7, %c0_8] : memref<2x256x128xf32, #tpu.memory_space<vmem>>, vector<2x256x128xf32>
    tpu.vector_store %arg6[%c0_6, %c0_7, %c0_8], %19 {strides = array<i32>} : memref<2x256x128xf32, #tpu.memory_space<vmem>>, vector<2x256x128xf32>,
    %c1_i32 = arith.constant 1 : i32
    %21 = arith.cmpi eq, %arg1, %c1_i32 : i32
    %22 = arith.extui %21 : i1 to i32
    %c0_i32_9 = arith.constant 0 : i32
    %23 = arith.cmpi ne, %22, %c0_i32_9 : i32
    scf.if %23 {
      %c0_10 = arith.constant 0 : index
      %c0_11 = arith.constant 0 : index
      %c0_12 = arith.constant 0 : index
      %24 = vector.load %arg6[%c0_10, %c0_11, %c0_12] : memref<2x256x128xf32, #tpu.memory_space<vmem>>, vector<2x256x128xf32>
      %cst_13 = arith.constant dense<0.000000e+00> : vector<2x256xf32>
      %25 = vector.multi_reduction <add>, %24, %cst_13 [2] : vector<2x256x128xf32> to vector<2x256xf32>
      %cst_14 = arith.constant 0.00166666671 : f32
      %26 = vector.broadcast %cst_14 : f32 to vector<2x256xf32>
      %27 = arith.mulf %25, %26 : vector<2x256xf32>
      %c0_15 = arith.constant 0 : index
      %c0_16 = arith.constant 0 : index
      %28 = vector.load %arg3[%c0_15, %c0_16] : memref<256x128xf32, #tpu.memory_space<vmem>>, vector<256x128xf32>
      %cst_17 = arith.constant dense<0.000000e+00> : vector<2x128xf32>
      %29 = tpu.matmul %27, %28, %cst_17 {dimension_numbers = #tpu.dot_dimension_numbers<[1], [0], [0], [1], [0, 0, 1, 1], [], []>} : vector<2x256xf32>, vector<256x128xf32>, vector<2x128xf32> -> vector<2x128xf32>
      %c0_18 = arith.constant 0 : index
      %c0_19 = arith.constant 0 : index
      %30 = vector.load %arg4[%c0_18, %c0_19] : memref<1x128xf32, #tpu.memory_space<vmem>>, vector<1x128xf32>
      %31 = vector.broadcast %30 : vector<1x128xf32> to vector<2x128xf32>
      %32 = arith.addf %29, %31 : vector<2x128xf32>
      %33 = arith.mulf %32, %32 : vector<2x128xf32>
      %cst_20 = arith.constant dense<0.000000e+00> : vector<2xf32>
      %34 = vector.multi_reduction <add>, %33, %cst_20 [1] : vector<2x128xf32> to vector<2xf32>
      %35 = vector.shape_cast %34 : vector<2xf32> to vector<2x1xf32>
      %cst_21 = arith.constant 1.000000e-24 : f32
      %36 = vector.broadcast %cst_21 : f32 to vector<2x1xf32>
      %37 = arith.maximumf %35, %36 : vector<2x1xf32>
      %38 = math.rsqrt %37 : vector<2x1xf32>
      %39 = vector.broadcast %38 : vector<2x1xf32> to vector<2x128xf32>
      %40 = arith.mulf %32, %39 : vector<2x128xf32>
      %c0_22 = arith.constant 0 : index
      %c0_23 = arith.constant 0 : index
      %c0_24 = arith.constant 0 : index
      %41 = vector.load %arg5[%c0_22, %c0_23, %c0_24] : memref<1x2x128xf32, #tpu.memory_space<vmem>>, vector<1x2x128xf32>
      %42 = vector.shape_cast %41 : vector<1x2x128xf32> to vector<2x128xf32>
      %43 = vector.shape_cast %40 : vector<2x128xf32> to vector<1x2x128xf32>
      tpu.vector_store %arg5[%c0_22, %c0_23, %c0_24], %43 {strides = array<i32>} : memref<1x2x128xf32, #tpu.memory_space<vmem>>, vector<1x2x128xf32>,
    } else {
    }
    return
  }
  func.func @transform_0(%arg0: i32, %arg1: i32) -> (i32, i32, i32) {
    %c0_i32 = arith.constant 0 : i32
    %c0_i32_0 = arith.constant 0 : i32
    return %arg0, %c0_i32, %arg1 : i32, i32, i32
  }
  func.func @transform_1(%arg0: i32, %arg1: i32) -> (i32, i32) {
    %c0_i32 = arith.constant 0 : i32
    %c0_i32_0 = arith.constant 0 : i32
    %c0_i32_1 = arith.constant 0 : i32
    return %c0_i32, %c0_i32_0 : i32, i32
  }
  func.func @transform_2(%arg0: i32, %arg1: i32) -> (i32, i32) {
    %c0_i32 = arith.constant 0 : i32
    %c0_i32_0 = arith.constant 0 : i32
    %c0_i32_1 = arith.constant 0 : i32
    return %c0_i32, %c0_i32_0 : i32, i32
  }
  func.func @transform_3(%arg0: i32, %arg1: i32) -> (i32, i32, i32) {
    %c0_i32 = arith.constant 0 : i32
    %c0_i32_0 = arith.constant 0 : i32
    %c0_i32_1 = arith.constant 0 : i32
    return %arg0, %c0_i32, %c0_i32_0 : i32, i32, i32
  }
}

</mosaic_0001>

<llo_original>
// kernel: _proj_head_single.1
$region0: #{_proj_head_single.1}
  #allocation0 [shape = 'u32[]', space=smem, size = 0x4, offset = 0x4, fixed_abs, tag = 'smem constant byte address 0x4 - core index']
  #allocation1 [shape = 'u32[144,128]{1,0:T(1,128)}', space=vmem, size = 0x12000, scoped, tag = 'internal scratch']
  #allocation2 [shape = 'f32[2,256,128]{2,1,0:T(8,128)}', space=vmem, size = 0x40000, scoped, tag = 'scratch operand']
  %s0 = inlined_call_operand.vmem [shape: f32[4,256,600], index: 0, kind: input, shape index: {}]
  %s1 = inlined_call_operand.vmem [shape: f32[256,128], index: 1, kind: input, shape index: {}]
  %s2 = inlined_call_operand.vmem [shape: f32[1,128], index: 2, kind: input, shape index: {}]
  %s3 = inlined_call_operand.hbm [shape: f32[2,2,128], index: 3, kind: output, shape index: {}]
  %s4 = sld [smem:[#allocation0]]
  $region105: #{_proj_head_single.1} parent=0
    _
  %s6 = ssub.s32 1, %s4
  %s7 = scalar_select 0, %s6, %s4
  $region1: #{_proj_head_single.1} parent=0
    #allocation3 [shape = 'u8[2097152]{0}', space=vmem, size = 0x200000, scoped, tag = 'input window, operand 0']
    #allocation4 [shape = 'u8[2048]{0}', space=vmem, size = 0x800, scoped, tag = 'output window, operand 0']
    #allocation5 [shape = 's32[2]{0}', space=sflag, size = 0x8, scoped, tag = 'scoped memory for _proj_head_single.1']
    %8 = vsyncpa [#allocation5], 0
    %s9 = scalar_lea.sflag [#allocation5], 1
    %10 = vsyncpa %s9, 0
    loop: start=0, step=1, limit=6
    $region2: #{_proj_head_single.1} parent=1 // loop_pre_header
      _
    $region3: #{_proj_head_single.1} parent=1 // loop_header
      %s12 = sphi 0, %s16
      %p13 = scmp.ge.s32.totalorder %s12, 6
      %s19 = sphi 0, %s31
      %s20 = sphi 0, %s27
      %s21 = sphi 0, %s19
      %s22 = sphi 0, %s20
      %s23 = sphi 0, %s21
      %s24 = sphi 0, %s22
      %s36 = sphi 0, %s38
      %s39 = sphi 0, %s36
      %s40 = sphi 0, %s39
      %s56 = sphi 0, %s40
      %s60 = sphi 0, %s60
      %s62 = sphi 0, %s60
      %s63 = sphi 0, %s62
      %s77 = sphi 0, %s63
      %s81 = sphi 0, %s81
      %s83 = sphi 0, %s81
      %s84 = sphi 0, %s83
      %s98 = sphi 0, %s84
      %s104 = sphi 0, %s106
      %s107 = sphi 0, %s104
      %s108 = sphi 0, %s107
      %s124 = sphi 0, %s108
    $region4: #{_proj_head_single.1} parent=1 // loop_header_branch
      %15 = sbr.rel (%p13) target = $region8
    $region5: #{_proj_head_single.1} parent=1 // loop_body
      %s17 = ssub.s32 %s12, 1
      %s18 = ssub.s32 %s12, 2
      %s25 = sadd.s32 1, %s20
      %p26 = scmp.ge.s32.totalorder %s25, 2
      %s27 = scalar_select %p26, 0, %s25
      %s28 = sadd.s32 1, %s19
      %s29 = scalar_select %p26, %s28, %s19
      %p30 = scmp.ge.s32.totalorder %s29, 2
      %s31 = scalar_select %p30, 0, %s29
      %s32 = ssub.s32 %s19, %s31
      %s33 = ssub.s32 %s20, %s27
      %s34 = sor.u32 %s32, %s33
      %p35 = scmp.eq.s32.totalorder %s34, 0
      %s37 = sadd.s32 %s36, 1
      %s38 = scalar_select %p35, %s36, %s37
      %p41 = pneg %p35
      %p42 = scmp.eq.s32.totalorder %s12, 3
      %p43 = por %p41, %p42
      %p44 = scmp.ne.s32.totalorder %s36, %s39
      %p45 = scmp.eq.s32.totalorder %s12, 0
      %p46 = por %p44, %p45
      %p47 = scmp.ne.s32.totalorder %s36, %s39
      %p48 = scmp.eq.s32.totalorder %s17, 3
      %p49 = por %p47, %p48
      %p50 = scmp.ne.s32.totalorder %s39, %s40
      %p51 = scmp.eq.s32.totalorder %s17, 0
      %p52 = por %p50, %p51
      %p53 = scmp.ne.s32.totalorder %s39, %s40
      %p54 = scmp.eq.s32.totalorder %s18, 3
      %p55 = por %p53, %p54
      %p57 = scmp.ne.s32.totalorder %s40, %s56
      %p58 = scmp.eq.s32.totalorder %s18, 0
      %p59 = por %p57, %p58
      %s61 = sadd.s32 %s60, 1
      %p64 = scmp.eq.s32.totalorder %s12, 3
      %p65 = scmp.ne.s32.totalorder %s60, %s62
      %p66 = scmp.eq.s32.totalorder %s12, 0
      %p67 = por %p65, %p66
      %p68 = scmp.ne.s32.totalorder %s60, %s62
      %p69 = scmp.eq.s32.totalorder %s17, 3
      %p70 = por %p68, %p69
      %p71 = scmp.ne.s32.totalorder %s62, %s63
      %p72 = scmp.eq.s32.totalorder %s17, 0
      %p73 = por %p71, %p72
      %p74 = scmp.ne.s32.totalorder %s62, %s63
      %p75 = scmp.eq.s32.totalorder %s18, 3
      %p76 = por %p74, %p75
      %p78 = scmp.ne.s32.totalorder %s63, %s77
      %p79 = scmp.eq.s32.totalorder %s18, 0
      %p80 = por %p78, %p79
      %s82 = sadd.s32 %s81, 1
      %p85 = scmp.eq.s32.totalorder %s12, 3
      %p86 = scmp.ne.s32.totalorder %s81, %s83
      %p87 = scmp.eq.s32.totalorder %s12, 0
      %p88 = por %p86, %p87
      %p89 = scmp.ne.s32.totalorder %s81, %s83
      %p90 = scmp.eq.s32.totalorder %s17, 3
      %p91 = por %p89, %p90
      %p92 = scmp.ne.s32.totalorder %s83, %s84
      %p93 = scmp.eq.s32.totalorder %s17, 0
      %p94 = por %p92, %p93
      %p95 = scmp.ne.s32.totalorder %s83, %s84
      %p96 = scmp.eq.s32.totalorder %s18, 3
      %p97 = por %p95, %p96
      %p99 = scmp.ne.s32.totalorder %s84, %s98
      %p100 = scmp.eq.s32.totalorder %s18, 0
      %p101 = por %p99, %p100
      %s102 = ssub.s32 %s19, %s31
      %p103 = scmp.eq.s32.totalorder %s102, 0
      %s105 = sadd.s32 %s104, 1
      %s106 = scalar_select %p103, %s104, %s105
      %p109 = pneg %p103
      %p110 = scmp.eq.s32.totalorder %s12, 3
      %p111 = por %p109, %p110
      %p112 = scmp.ne.s32.totalorder %s104, %s107
      %p113 = scmp.eq.s32.totalorder %s12, 0
      %p114 = por %p112, %p113
      %p115 = scmp.ne.s32.totalorder %s104, %s107
      %p116 = scmp.eq.s32.totalorder %s17, 3
      %p117 = por %p115, %p116
      %p118 = scmp.ne.s32.totalorder %s107, %s108
      %p119 = scmp.eq.s32.totalorder %s17, 0
      %p120 = por %p118, %p119
      %p121 = scmp.ne.s32.totalorder %s107, %s108
      %p122 = scmp.eq.s32.totalorder %s18, 3
      %p123 = por %p121, %p122
      %p125 = scmp.ne.s32.totalorder %s108, %s124
      %p126 = scmp.eq.s32.totalorder %s18, 0
      %p127 = por %p125, %p126
      %p128 = scmp.le.s32.totalorder 1, %s12
      %p129 = scmp.lt.s32.totalorder %s12, 5
      %p130 = pnand %p128, %p129
      %p131 = pneg %p130
      // Predicated region
      $region9: #{_proj_head_single.1} parent=5 // pred_check
        _
      $region10: #{_proj_head_single.1} parent=5 // pred_check_branch
        %133 = sbr.rel (%p130) target = $region12
      $region11: #{_proj_head_single.1} parent=5 // pred_region
        %s134 = ssub.s32 %s12, 1
        // Predicated region
        $region13: #{_proj_head_single.1} parent=11 // pred_check
          %p135 = pneg %p73
        $region14: #{_proj_head_single.1} parent=11 // pred_check_branch
          %137 = sbr.rel (%p135) target = $region16
        $region15: #{_proj_head_single.1} parent=11 // pred_region
          _
        $region16: #{_proj_head_single.1} parent=11 // pred_fallthru
          _
        // Predicated region
        $region17: #{_proj_head_single.1} parent=11 // pred_check
          %p138 = pneg %p94
        $region18: #{_proj_head_single.1} parent=11 // pred_check_branch
          %140 = sbr.rel (%p138) target = $region20
        $region19: #{_proj_head_single.1} parent=11 // pred_region
          _
        $region20: #{_proj_head_single.1} parent=11 // pred_fallthru
          _
      $region12: #{_proj_head_single.1} parent=5 // pred_fallthru
        _
      %p141 = scmp.lt.s32.totalorder %s12, 4
      // Predicated region
      $region21: #{_proj_head_single.1} parent=5 // pred_check
        %p142 = pneg %p141
      $region22: #{_proj_head_single.1} parent=5 // pred_check_branch
        %144 = sbr.rel (%p142) target = $region24
      $region23: #{_proj_head_single.1} parent=5 // pred_region
        // Predicated region
        $region25: #{_proj_head_single.1} parent=23 // pred_check
          %p145 = pneg %p46
        $region26: #{_proj_head_single.1} parent=23 // pred_check_branch
          %147 = sbr.rel (%p145) target = $region28
        $region27: #{_proj_head_single.1} parent=23 // pred_region
          %s148 = sand.u32 %s36, 1
          %s149 = sand.u32 %s36, 1
          %s150 = smul.addr %s149, 2048
          %s151 = scalar_lea.vmem [#allocation3], %s150
          %s152 = smul.u32 2, %s19
          %s153 = smul.u32 4, %s20
          %s154 = ssub.s32 5, %s153
          %p155 = scmp.lt.s32.totalorder %s154, 4
          %s156 = scalar_select %p155, %s154, 4
          %s157 = smul.u32 8192, %s156
          %p158 = scmp.ne.s32.totalorder 0, %s157
          %s159 = smul.addr %s152, 160
          %s160 = sadd.s32 %s153, %s159
          %s161 = smul.addr %s160, 8
          %s162 = scalar_lea.vmem %s0, %s161
          %s163 = smul.u32 %s156, 8
          // Predicated region
          $region29: #{_proj_head_single.1} parent=27 // pred_check
            %p164 = pneg %p158
          $region30: #{_proj_head_single.1} parent=27 // pred_check_branch
            %166 = sbr.rel (%p164) target = $region32
          $region31: #{_proj_head_single.1} parent=27 // pred_region
            %p167 = scmp.lt.u32.totalorder %s163, 8
            %p168 = pneg %p167
            // Predicated region
            $region33: #{_proj_head_single.1} parent=31 // pred_check
              _
            $region34: #{_proj_head_single.1} parent=31 // pred_check_branch
              %170 = sbr.rel (%p167) target = $region36
            $region35: #{_proj_head_single.1} parent=31 // pred_region
              %s312 = sand.u32 %s163, 7
              %p313 = scmp.eq.s32.totalorder %s312, 0
              // Predicated region
              $region48: #{_proj_head_single.1} parent=35 // pred_check
                %p314 = pneg %p313
              $region49: #{_proj_head_single.1} parent=35 // pred_check_branch
                %316 = sbr.rel (%p314) target = $region51
              $region50: #{_proj_head_single.1} parent=35 // pred_region
                %s317 = sshrl.u32 %s163, 3
                // While loop
                $region52: #{_proj_head_single.1} parent=50 // loop_pre_header
                  _
                $region53: #{_proj_head_single.1} parent=50 // loop_header
                  %s321 = sphi 0, %s323
                  %p322 = scmp.ge.s32.totalorder %s321, %s317
                  %s326 = sphi 0, %s459
                  %s327 = sphi %s162, %s462
                  %s328 = sphi %s151, %s463
                $region54: #{_proj_head_single.1} parent=50 // loop_header_branch
                  %325 = sbr.rel (%p322) target = $region58
                $region55: #{_proj_head_single.1} parent=50 // loop_body
                  %v329 = vld [vmem:[%s327] sm:$0xff]
                  %330 = vst [vmem:[%s328] sm:$0xff] %v329
                  %v331 = vld [vmem:[%s327 + $0x28] sm:$0xff]
                  %332 = vst [vmem:[%s328 + $0x20] sm:$0xff] %v331
                  %v333 = vld [vmem:[%s327 + $0x50] sm:$0xff]
                  %334 = vst [vmem:[%s328 + $0x40] sm:$0xff] %v333
                  %v335 = vld [vmem:[%s327 + $0x78] sm:$0xff]
                  %336 = vst [vmem:[%s328 + $0x60] sm:$0xff] %v335
                  %v337 = vld [vmem:[%s327 + $0xa0] sm:$0xff]
                  %338 = vst [vmem:[%s328 + $0x80] sm:$0xff] %v337
                  %v339 = vld [vmem:[%s327 + $0xc8] sm:$0xff]
                  %340 = vst [vmem:[%s328 + $0xa0] sm:$0xff] %v339
                  %v341 = vld [vmem:[%s327 + $0xf0] sm:$0xff]
                  %342 = vst [vmem:[%s328 + $0xc0] sm:$0xff] %v341
                  %v343 = vld [vmem:[%s327 + $0x118] sm:$0xff]
                  %344 = vst [vmem:[%s328 + $0xe0] sm:$0xff] %v343
                  %v345 = vld [vmem:[%s327 + $0x140] sm:$0xff]
                  %346 = vst [vmem:[%s328 + $0x100] sm:$0xff] %v345
                  %v347 = vld [vmem:[%s327 + $0x168] sm:$0xff]
                  %348 = vst [vmem:[%s328 + $0x120] sm:$0xff] %v347
                  %v349 = vld [vmem:[%s327 + $0x190] sm:$0xff]
                  %350 = vst [vmem:[%s328 + $0x140] sm:$0xff] %v349
                  %v351 = vld [vmem:[%s327 + $0x1b8] sm:$0xff]
                  %352 = vst [vmem:[%s328 + $0x160] sm:$0xff] %v351
                  %v353 = vld [vmem:[%s327 + $0x1e0] sm:$0xff]
                  %354 = vst [vmem:[%s328 + $0x180] sm:$0xff] %v353
                  %v355 = vld [vmem:[%s327 + $0x208] sm:$0xff]
                  %356 = vst [vmem:[%s328 + $0x1a0] sm:$0xff] %v355
                  %v357 = vld [vmem:[%s327 + $0x230] sm:$0xff]
                  %358 = vst [vmem:[%s328 + $0x1c0] sm:$0xff] %v357
                  %v359 = vld [vmem:[%s327 + $0x258] sm:$0xff]
                  %360 = vst [vmem:[%s328 + $0x1e0] sm:$0xff] %v359
                  %v361 = vld [vmem:[%s327 + $0x280] sm:$0xff]
                  %362 = vst [vmem:[%s328 + $0x200] sm:$0xff] %v361
                  %v363 = vld [vmem:[%s327 + $0x2a8] sm:$0xff]
                  %364 = vst [vmem:[%s328 + $0x220] sm:$0xff] %v363
                  %v365 = vld [vmem:[%s327 + $0x2d0] sm:$0xff]
                  %366 = vst [vmem:[%s328 + $0x240] sm:$0xff] %v365
                  %v367 = vld [vmem:[%s327 + $0x2f8] sm:$0xff]
                  %368 = vst [vmem:[%s328 + $0x260] sm:$0xff] %v367
                  %v369 = vld [vmem:[%s327 + $0x320] sm:$0xff]
                  %370 = vst [vmem:[%s328 + $0x280] sm:$0xff] %v369
                  %v371 = vld [vmem:[%s327 + $0x348] sm:$0xff]
                  %372 = vst [vmem:[%s328 + $0x2a0] sm:$0xff] %v371
                  %v373 = vld [vmem:[%s327 + $0x370] sm:$0xff]
                  %374 = vst [vmem:[%s328 + $0x2c0] sm:$0xff] %v373
                  %v375 = vld [vmem:[%s327 + $0x398] sm:$0xff]
                  %376 = vst [vmem:[%s328 + $0x2e0] sm:$0xff] %v375
                  %v377 = vld [vmem:[%s327 + $0x3c0] sm:$0xff]
                  %378 = vst [vmem:[%s328 + $0x300] sm:$0xff] %v377
                  %v379 = vld [vmem:[%s327 + $0x3e8] sm:$0xff]
                  %380 = vst [vmem:[%s328 + $0x320] sm:$0xff] %v379
                  %v381 = vld [vmem:[%s327 + $0x410] sm:$0xff]
                  %382 = vst [vmem:[%s328 + $0x340] sm:$0xff] %v381
                  %v383 = vld [vmem:[%s327 + $0x438] sm:$0xff]
                  %384 = vst [vmem:[%s328 + $0x360] sm:$0xff] %v383
                  %v385 = vld [vmem:[%s327 + $0x460] sm:$0xff]
                  %386 = vst [vmem:[%s328 + $0x380] sm:$0xff] %v385
                  %v387 = vld [vmem:[%s327 + $0x488] sm:$0xff]
                  %388 = vst [vmem:[%s328 + $0x3a0] sm:$0xff] %v387
                  %v389 = vld [vmem:[%s327 + $0x4b0] sm:$0xff]
                  %390 = vst [vmem:[%s328 + $0x3c0] sm:$0xff] %v389
                  %v391 = vld [vmem:[%s327 + $0x4d8] sm:$0xff]
                  %392 = vst [vmem:[%s328 + $0x3e0] sm:$0xff] %v391
                  %v393 = vld [vmem:[%s327 + $0x500] sm:$0xff]
                  %394 = vst [vmem:[%s328 + $0x400] sm:$0xff] %v393
                  %v395 = vld [vmem:[%s327 + $0x528] sm:$0xff]
                  %396 = vst [vmem:[%s328 + $0x420] sm:$0xff] %v395
                  %v397 = vld [vmem:[%s327 + $0x550] sm:$0xff]
                  %398 = vst [vmem:[%s328 + $0x440] sm:$0xff] %v397
                  %v399 = vld [vmem:[%s327 + $0x578] sm:$0xff]
                  %400 = vst [vmem:[%s328 + $0x460] sm:$0xff] %v399
                  %v401 = vld [vmem:[%s327 + $0x5a0] sm:$0xff]
                  %402 = vst [vmem:[%s328 + $0x480] sm:$0xff] %v401
                  %v403 = vld [vmem:[%s327 + $0x5c8] sm:$0xff]
                  %404 = vst [vmem:[%s328 + $0x4a0] sm:$0xff] %v403
                  %v405 = vld [vmem:[%s327 + $0x5f0] sm:$0xff]
                  %406 = vst [vmem:[%s328 + $0x4c0] sm:$0xff] %v405
                  %v407 = vld [vmem:[%s327 + $0x618] sm:$0xff]
                  %408 = vst [vmem:[%s328 + $0x4e0] sm:$0xff] %v407
                  %v409 = vld [vmem:[%s327 + $0x640] sm:$0xff]
                  %410 = vst [vmem:[%s328 + $0x500] sm:$0xff] %v409
                  %v411 = vld [vmem:[%s327 + $0x668] sm:$0xff]
                  %412 = vst [vmem:[%s328 + $0x520] sm:$0xff] %v411
                  %v413 = vld [vmem:[%s327 + $0x690] sm:$0xff]
                  %414 = vst [vmem:[%s328 + $0x540] sm:$0xff] %v413
                  %v415 = vld [vmem:[%s327 + $0x6b8] sm:$0xff]
                  %416 = vst [vmem:[%s328 + $0x560] sm:$0xff] %v415
                  %v417 = vld [vmem:[%s327 + $0x6e0] sm:$0xff]
                  %418 = vst [vmem:[%s328 + $0x580] sm:$0xff] %v417
                  %v419 = vld [vmem:[%s327 + $0x708] sm:$0xff]
                  %420 = vst [vmem:[%s328 + $0x5a0] sm:$0xff] %v419
                  %v421 = vld [vmem:[%s327 + $0x730] sm:$0xff]
                  %422 = vst [vmem:[%s328 + $0x5c0] sm:$0xff] %v421
                  %v423 = vld [vmem:[%s327 + $0x758] sm:$0xff]
                  %424 = vst [vmem:[%s328 + $0x5e0] sm:$0xff] %v423
                  %v425 = vld [vmem:[%s327 + $0x780] sm:$0xff]
                  %426 = vst [vmem:[%s328 + $0x600] sm:$0xff] %v425
                  %v427 = vld [vmem:[%s327 + $0x7a8] sm:$0xff]
                  %428 = vst [vmem:[%s328 + $0x620] sm:$0xff] %v427
                  %v429 = vld [vmem:[%s327 + $0x7d0] sm:$0xff]
                  %430 = vst [vmem:[%s328 + $0x640] sm:$0xff] %v429
                  %v431 = vld [vmem:[%s327 + $0x7f8] sm:$0xff]
                  %432 = vst [vmem:[%s328 + $0x660] sm:$0xff] %v431
                  %v433 = vld [vmem:[%s327 + $0x820] sm:$0xff]
                  %434 = vst [vmem:[%s328 + $0x680] sm:$0xff] %v433
                  %v435 = vld [vmem:[%s327 + $0x848] sm:$0xff]
                  %436 = vst [vmem:[%s328 + $0x6a0] sm:$0xff] %v435
                  %v437 = vld [vmem:[%s327 + $0x870] sm:$0xff]
                  %438 = vst [vmem:[%s328 + $0x6c0] sm:$0xff] %v437
                  %v439 = vld [vmem:[%s327 + $0x898] sm:$0xff]
                  %440 = vst [vmem:[%s328 + $0x6e0] sm:$0xff] %v439
                  %v441 = vld [vmem:[%s327 + $0x8c0] sm:$0xff]
                  %442 = vst [vmem:[%s328 + $0x700] sm:$0xff] %v441
                  %v443 = vld [vmem:[%s327 + $0x8e8] sm:$0xff]
                  %444 = vst [vmem:[%s328 + $0x720] sm:$0xff] %v443
                  %v445 = vld [vmem:[%s327 + $0x910] sm:$0xff]
                  %446 = vst [vmem:[%s328 + $0x740] sm:$0xff] %v445
                  %v447 = vld [vmem:[%s327 + $0x938] sm:$0xff]
                  %448 = vst [vmem:[%s328 + $0x760] sm:$0xff] %v447
                  %v449 = vld [vmem:[%s327 + $0x960] sm:$0xff]
                  %450 = vst [vmem:[%s328 + $0x780] sm:$0xff] %v449
                  %v451 = vld [vmem:[%s327 + $0x988] sm:$0xff]
                  %452 = vst [vmem:[%s328 + $0x7a0] sm:$0xff] %v451
                  %v453 = vld [vmem:[%s327 + $0x9b0] sm:$0xff]
                  %454 = vst [vmem:[%s328 + $0x7c0] sm:$0xff] %v453
                  %v455 = vld [vmem:[%s327 + $0x9d8] sm:$0xff]
                  %456 = vst [vmem:[%s328 + $0x7e0] sm:$0xff] %v455
                  %s457 = sadd.s32 1, %s326
                  %p458 = scmp.ge.s32.totalorder %s457, %s317
                  %s459 = scalar_select %p458, 0, %s457
                  %s460 = smul.u32 %s459, 8
                  %s461 = smul.u32 %s459, 8
                  %s462 = scalar_lea.vmem %s162, %s460
                  %s463 = scalar_lea.vmem %s151, %s461 [#allocation3]
                $region56: #{_proj_head_single.1} parent=50 // loop_footer
                  %s323 = sadd.s32 %s321, 1
                $region57: #{_proj_head_single.1} parent=50 // loop_footer_branch
                  %320 = sbr.rel target = $region53
                $region58: #{_proj_head_single.1} parent=50 // loop_exit
                  _
              $region51: #{_proj_head_single.1} parent=35 // pred_fallthru
                _
              %p464 = pneg %p313
              // Predicated region
              $region59: #{_proj_head_single.1} parent=35 // pred_check
                _
              $region60: #{_proj_head_single.1} parent=35 // pred_check_branch
                %466 = sbr.rel (%p313) target = $region62
              $region61: #{_proj_head_single.1} parent=35 // pred_region
                %s467 = sand.u32 %s163, 7
                %s468 = ssub.s32 %s163, %s467
                %s469 = scalar_lea.vmem %s162, %s468
                %s470 = ssub.s32 %s163, %s467
                %s471 = scalar_lea.vmem %s151, %s470 [#allocation3]
                %s472 = sshrl.u32 %s163, 3
                // While loop
                $region63: #{_proj_head_single.1} parent=61 // loop_pre_header
                  _
                $region64: #{_proj_head_single.1} parent=61 // loop_header
                  %s476 = sphi 0, %s478
                  %p477 = scmp.ge.s32.totalorder %s476, %s472
                  %s481 = sphi 0, %s614
                  %s482 = sphi %s162, %s617
                  %s483 = sphi %s151, %s618
                $region65: #{_proj_head_single.1} parent=61 // loop_header_branch
                  %480 = sbr.rel (%p477) target = $region69
                $region66: #{_proj_head_single.1} parent=61 // loop_body
                  %v484 = vld [vmem:[%s482] sm:$0xff]
                  %485 = vst [vmem:[%s483] sm:$0xff] %v484
                  %v486 = vld [vmem:[%s482 + $0x28] sm:$0xff]
                  %487 = vst [vmem:[%s483 + $0x20] sm:$0xff] %v486
                  %v488 = vld [vmem:[%s482 + $0x50] sm:$0xff]
                  %489 = vst [vmem:[%s483 + $0x40] sm:$0xff] %v488
                  %v490 = vld [vmem:[%s482 + $0x78] sm:$0xff]
                  %491 = vst [vmem:[%s483 + $0x60] sm:$0xff] %v490
                  %v492 = vld [vmem:[%s482 + $0xa0] sm:$0xff]
                  %493 = vst [vmem:[%s483 + $0x80] sm:$0xff] %v492
                  %v494 = vld [vmem:[%s482 + $0xc8] sm:$0xff]
                  %495 = vst [vmem:[%s483 + $0xa0] sm:$0xff] %v494
                  %v496 = vld [vmem:[%s482 + $0xf0] sm:$0xff]
                  %497 = vst [vmem:[%s483 + $0xc0] sm:$0xff] %v496
                  %v498 = vld [vmem:[%s482 + $0x118] sm:$0xff]
                  %499 = vst [vmem:[%s483 + $0xe0] sm:$0xff] %v498
                  %v500 = vld [vmem:[%s482 + $0x140] sm:$0xff]
                  %501 = vst [vmem:[%s483 + $0x100] sm:$0xff] %v500
                  %v502 = vld [vmem:[%s482 + $0x168] sm:$0xff]
                  %503 = vst [vmem:[%s483 + $0x120] sm:$0xff] %v502
                  %v504 = vld [vmem:[%s482 + $0x190] sm:$0xff]
                  %505 = vst [vmem:[%s483 + $0x140] sm:$0xff] %v504
                  %v506 = vld [vmem:[%s482 + $0x1b8] sm:$0xff]
                  %507 = vst [vmem:[%s483 + $0x160] sm:$0xff] %v506
                  %v508 = vld [vmem:[%s482 + $0x1e0] sm:$0xff]
                  %509 = vst [vmem:[%s483 + $0x180] sm:$0xff] %v508
                  %v510 = vld [vmem:[%s482 + $0x208] sm:$0xff]
                  %511 = vst [vmem:[%s483 + $0x1a0] sm:$0xff] %v510
                  %v512 = vld [vmem:[%s482 + $0x230] sm:$0xff]
                  %513 = vst [vmem:[%s483 + $0x1c0] sm:$0xff] %v512
                  %v514 = vld [vmem:[%s482 + $0x258] sm:$0xff]
                  %515 = vst [vmem:[%s483 + $0x1e0] sm:$0xff] %v514
                  %v516 = vld [vmem:[%s482 + $0x280] sm:$0xff]
                  %517 = vst [vmem:[%s483 + $0x200] sm:$0xff] %v516
                  %v518 = vld [vmem:[%s482 + $0x2a8] sm:$0xff]
                  %519 = vst [vmem:[%s483 + $0x220] sm:$0xff] %v518
                  %v520 = vld [vmem:[%s482 + $0x2d0] sm:$0xff]
                  %521 = vst [vmem:[%s483 + $0x240] sm:$0xff] %v520
                  %v522 = vld [vmem:[%s482 + $0x2f8] sm:$0xff]
                  %523 = vst [vmem:[%s483 + $0x260] sm:$0xff] %v522
                  %v524 = vld [vmem:[%s482 + $0x320] sm:$0xff]
                  %525 = vst [vmem:[%s483 + $0x280] sm:$0xff] %v524
                  %v526 = vld [vmem:[%s482 + $0x348] sm:$0xff]
                  %527 = vst [vmem:[%s483 + $0x2a0] sm:$0xff] %v526
                  %v528 = vld [vmem:[%s482 + $0x370] sm:$0xff]
                  %529 = vst [vmem:[%s483 + $0x2c0] sm:$0xff] %v528
                  %v530 = vld [vmem:[%s482 + $0x398] sm:$0xff]
                  %531 = vst [vmem:[%s483 + $0x2e0] sm:$0xff] %v530
                  %v532 = vld [vmem:[%s482 + $0x3c0] sm:$0xff]
                  %533 = vst [vmem:[%s483 + $0x300] sm:$0xff] %v532
                  %v534 = vld [vmem:[%s482 + $0x3e8] sm:$0xff]
                  %535 = vst [vmem:[%s483 + $0x320] sm:$0xff] %v534
                  %v536 = vld [vmem:[%s482 + $0x410] sm:$0xff]
                  %537 = vst [vmem:[%s483 + $0x340] sm:$0xff] %v536
                  %v538 = vld [vmem:[%s482 + $0x438] sm:$0xff]
                  %539 = vst [vmem:[%s483 + $0x360] sm:$0xff] %v538
                  %v540 = vld [vmem:[%s482 + $0x460] sm:$0xff]
                  %541 = vst [vmem:[%s483 + $0x380] sm:$0xff] %v540
                  %v542 = vld [vmem:[%s482 + $0x488] sm:$0xff]
                  %543 = vst [vmem:[%s483 + $0x3a0] sm:$0xff] %v542
                  %v544 = vld [vmem:[%s482 + $0x4b0] sm:$0xff]
                  %545 = vst [vmem:[%s483 + $0x3c0] sm:$0xff] %v544
                  %v546 = vld [vmem:[%s482 + $0x4d8] sm:$0xff]
                  %547 = vst [vmem:[%s483 + $0x3e0] sm:$0xff] %v546
                  %v548 = vld [vmem:[%s482 + $0x500] sm:$0xff]
                  %549 = vst [vmem:[%s483 + $0x400] sm:$0xff] %v548
                  %v550 = vld [vmem:[%s482 + $0x528] sm:$0xff]
                  %551 = vst [vmem:[%s483 + $0x420] sm:$0xff] %v550
                  %v552 = vld [vmem:[%s482 + $0x550] sm:$0xff]
                  %553 = vst [vmem:[%s483 + $0x440] sm:$0xff] %v552
                  %v554 = vld [vmem:[%s482 + $0x578] sm:$0xff]
                  %555 = vst [vmem:[%s483 + $0x460] sm:$0xff] %v554
                  %v556 = vld [vmem:[%s482 + $0x5a0] sm:$0xff]
                  %557 = vst [vmem:[%s483 + $0x480] sm:$0xff] %v556
                  %v558 = vld [vmem:[%s482 + $0x5c8] sm:$0xff]
                  %559 = vst [vmem:[%s483 + $0x4a0] sm:$0xff] %v558
                  %v560 = vld [vmem:[%s482 + $0x5f0] sm:$0xff]
                  %561 = vst [vmem:[%s483 + $0x4c0] sm:$0xff] %v560
                  %v562 = vld [vmem:[%s482 + $0x618] sm:$0xff]
                  %563 = vst [vmem:[%s483 + $0x4e0] sm:$0xff] %v562
                  %v564 = vld [vmem:[%s482 + $0x640] sm:$0xff]
                  %565 = vst [vmem:[%s483 + $0x500] sm:$0xff] %v564
                  %v566 = vld [vmem:[%s482 + $0x668] sm:$0xff]
                  %567 = vst [vmem:[%s483 + $0x520] sm:$0xff] %v566
                  %v568 = vld [vmem:[%s482 + $0x690] sm:$0xff]
                  %569 = vst [vmem:[%s483 + $0x540] sm:$0xff] %v568
                  %v570 = vld [vmem:[%s482 + $0x6b8] sm:$0xff]
                  %571 = vst [vmem:[%s483 + $0x560] sm:$0xff] %v570
                  %v572 = vld [vmem:[%s482 + $0x6e0] sm:$0xff]
                  %573 = vst [vmem:[%s483 + $0x580] sm:$0xff] %v572
                  %v574 = vld [vmem:[%s482 + $0x708] sm:$0xff]
                  %575 = vst [vmem:[%s483 + $0x5a0] sm:$0xff] %v574
                  %v576 = vld [vmem:[%s482 + $0x730] sm:$0xff]
                  %577 = vst [vmem:[%s483 + $0x5c0] sm:$0xff] %v576
                  %v578 = vld [vmem:[%s482 + $0x758] sm:$0xff]
                  %579 = vst [vmem:[%s483 + $0x5e0] sm:$0xff] %v578
                  %v580 = vld [vmem:[%s482 + $0x780] sm:$0xff]
                  %581 = vst [vmem:[%s483 + $0x600] sm:$0xff] %v580
                  %v582 = vld [vmem:[%s482 + $0x7a8] sm:$0xff]
                  %583 = vst [vmem:[%s483 + $0x620] sm:$0xff] %v582
                  %v584 = vld [vmem:[%s482 + $0x7d0] sm:$0xff]
                  %585 = vst [vmem:[%s483 + $0x640] sm:$0xff] %v584
                  %v586 = vld [vmem:[%s482 + $0x7f8] sm:$0xff]
                  %587 = vst [vmem:[%s483 + $0x660] sm:$0xff] %v586
                  %v588 = vld [vmem:[%s482 + $0x820] sm:$0xff]
                  %589 = vst [vmem:[%s483 + $0x680] sm:$0xff] %v588
                  %v590 = vld [vmem:[%s482 + $0x848] sm:$0xff]
                  %591 = vst [vmem:[%s483 + $0x6a0] sm:$0xff] %v590
                  %v592 = vld [vmem:[%s482 + $0x870] sm:$0xff]
                  %593 = vst [vmem:[%s483 + $0x6c0] sm:$0xff] %v592
                  %v594 = vld [vmem:[%s482 + $0x898] sm:$0xff]
                  %595 = vst [vmem:[%s483 + $0x6e0] sm:$0xff] %v594
                  %v596 = vld [vmem:[%s482 + $0x8c0] sm:$0xff]
                  %597 = vst [vmem:[%s483 + $0x700] sm:$0xff] %v596
                  %v598 = vld [vmem:[%s482 + $0x8e8] sm:$0xff]
                  %599 = vst [vmem:[%s483 + $0x720] sm:$0xff] %v598
                  %v600 = vld [vmem:[%s482 + $0x910] sm:$0xff]
                  %601 = vst [vmem:[%s483 + $0x740] sm:$0xff] %v600
                  %v602 = vld [vmem:[%s482 + $0x938] sm:$0xff]
                  %603 = vst [vmem:[%s483 + $0x760] sm:$0xff] %v602
                  %v604 = vld [vmem:[%s482 + $0x960] sm:$0xff]
                  %605 = vst [vmem:[%s483 + $0x780] sm:$0xff] %v604
                  %v606 = vld [vmem:[%s482 + $0x988] sm:$0xff]
                  %607 = vst [vmem:[%s483 + $0x7a0] sm:$0xff] %v606
                  %v608 = vld [vmem:[%s482 + $0x9b0] sm:$0xff]
                  %609 = vst [vmem:[%s483 + $0x7c0] sm:$0xff] %v608
                  %v610 = vld [vmem:[%s482 + $0x9d8] sm:$0xff]
                  %611 = vst [vmem:[%s483 + $0x7e0] sm:$0xff] %v610
                  %s612 = sadd.s32 1, %s481
                  %p613 = scmp.ge.s32.totalorder %s612, %s472
                  %s614 = scalar_select %p613, 0, %s612
                  %s615 = smul.u32 %s614, 8
                  %s616 = smul.u32 %s614, 8
                  %s617 = scalar_lea.vmem %s162, %s615
                  %s618 = scalar_lea.vmem %s151, %s616 [#allocation3]
                $region67: #{_proj_head_single.1} parent=61 // loop_footer
                  %s478 = sadd.s32 %s476, 1
                $region68: #{_proj_head_single.1} parent=61 // loop_footer_branch
                  %475 = sbr.rel target = $region64
                $region69: #{_proj_head_single.1} parent=61 // loop_exit
                  _
                %s619 = sshll.u32 1, %s467
                %s620 = ssub.s32 %s619, 1
                loop: start=0, step=1, limit=1
                $region70: #{_proj_head_single.1} parent=61 // loop_pre_header
                  _
                $region71: #{_proj_head_single.1} parent=61 // loop_header
                  %s622 = sphi 0, %s626
                  %p623 = scmp.ge.s32.totalorder %s622, 1
                  %s627 = sphi %s469, %s469
                  %s628 = sphi %s471, %s471
                $region72: #{_proj_head_single.1} parent=61 // loop_header_branch
                  %625 = sbr.rel (%p623) target = $region76
                $region73: #{_proj_head_single.1} parent=61 // loop_body
                  %v629 = vld [vmem:[%s627] sm:%s620]
                  %630 = vst [vmem:[%s628] sm:%s620] %v629
                  %v631 = vld [vmem:[%s627 + $0x28] sm:%s620]
                  %632 = vst [vmem:[%s628 + $0x20] sm:%s620] %v631
                  %v633 = vld [vmem:[%s627 + $0x50] sm:%s620]
                  %634 = vst [vmem:[%s628 + $0x40] sm:%s620] %v633
                  %v635 = vld [vmem:[%s627 + $0x78] sm:%s620]
                  %636 = vst [vmem:[%s628 + $0x60] sm:%s620] %v635
                  %v637 = vld [vmem:[%s627 + $0xa0] sm:%s620]
                  %638 = vst [vmem:[%s628 + $0x80] sm:%s620] %v637
                  %v639 = vld [vmem:[%s627 + $0xc8] sm:%s620]
                  %640 = vst [vmem:[%s628 + $0xa0] sm:%s620] %v639
                  %v641 = vld [vmem:[%s627 + $0xf0] sm:%s620]
                  %642 = vst [vmem:[%s628 + $0xc0] sm:%s620] %v641
                  %v643 = vld [vmem:[%s627 + $0x118] sm:%s620]
                  %644 = vst [vmem:[%s628 + $0xe0] sm:%s620] %v643
                  %v645 = vld [vmem:[%s627 + $0x140] sm:%s620]
                  %646 = vst [vmem:[%s628 + $0x100] sm:%s620] %v645
                  %v647 = vld [vmem:[%s627 + $0x168] sm:%s620]
                  %648 = vst [vmem:[%s628 + $0x120] sm:%s620] %v647
                  %v649 = vld [vmem:[%s627 + $0x190] sm:%s620]
                  %650 = vst [vmem:[%s628 + $0x140] sm:%s620] %v649
                  %v651 = vld [vmem:[%s627 + $0x1b8] sm:%s620]
                  %652 = vst [vmem:[%s628 + $0x160] sm:%s620] %v651
                  %v653 = vld [vmem:[%s627 + $0x1e0] sm:%s620]
                  %654 = vst [vmem:[%s628 + $0x180] sm:%s620] %v653
                  %v655 = vld [vmem:[%s627 + $0x208] sm:%s620]
                  %656 = vst [vmem:[%s628 + $0x1a0] sm:%s620] %v655
                  %v657 = vld [vmem:[%s627 + $0x230] sm:%s620]
                  %658 = vst [vmem:[%s628 + $0x1c0] sm:%s620] %v657
                  %v659 = vld [vmem:[%s627 + $0x258] sm:%s620]
                  %660 = vst [vmem:[%s628 + $0x1e0] sm:%s620] %v659
                  %v661 = vld [vmem:[%s627 + $0x280] sm:%s620]
                  %662 = vst [vmem:[%s628 + $0x200] sm:%s620] %v661
                  %v663 = vld [vmem:[%s627 + $0x2a8] sm:%s620]
                  %664 = vst [vmem:[%s628 + $0x220] sm:%s620] %v663
                  %v665 = vld [vmem:[%s627 + $0x2d0] sm:%s620]
                  %666 = vst [vmem:[%s628 + $0x240] sm:%s620] %v665
                  %v667 = vld [vmem:[%s627 + $0x2f8] sm:%s620]
                  %668 = vst [vmem:[%s628 + $0x260] sm:%s620] %v667
                  %v669 = vld [vmem:[%s627 + $0x320] sm:%s620]
                  %670 = vst [vmem:[%s628 + $0x280] sm:%s620] %v669
                  %v671 = vld [vmem:[%s627 + $0x348] sm:%s620]
                  %672 = vst [vmem:[%s628 + $0x2a0] sm:%s620] %v671
                  %v673 = vld [vmem:[%s627 + $0x370] sm:%s620]
                  %674 = vst [vmem:[%s628 + $0x2c0] sm:%s620] %v673
                  %v675 = vld [vmem:[%s627 + $0x398] sm:%s620]
                  %676 = vst [vmem:[%s628 + $0x2e0] sm:%s620] %v675
                  %v677 = vld [vmem:[%s627 + $0x3c0] sm:%s620]
                  %678 = vst [vmem:[%s628 + $0x300] sm:%s620] %v677
                  %v679 = vld [vmem:[%s627 + $0x3e8] sm:%s620]
                  %680 = vst [vmem:[%s628 + $0x320] sm:%s620] %v679
                  %v681 = vld [vmem:[%s627 + $0x410] sm:%s620]
                  %682 = vst [vmem:[%s628 + $0x340] sm:%s620] %v681
                  %v683 = vld [vmem:[%s627 + $0x438] sm:%s620]
                  %684 = vst [vmem:[%s628 + $0x360] sm:%s620] %v683
                  %v685 = vld [vmem:[%s627 + $0x460] sm:%s620]
                  %686 = vst [vmem:[%s628 + $0x380] sm:%s620] %v685
                  %v687 = vld [vmem:[%s627 + $0x488] sm:%s620]
                  %688 = vst [vmem:[%s628 + $0x3a0] sm:%s620] %v687
                  %v689 = vld [vmem:[%s627 + $0x4b0] sm:%s620]
                  %690 = vst [vmem:[%s628 + $0x3c0] sm:%s620] %v689
                  %v691 = vld [vmem:[%s627 + $0x4d8] sm:%s620]
                  %692 = vst [vmem:[%s628 + $0x3e0] sm:%s620] %v691
                  %v693 = vld [vmem:[%s627 + $0x500] sm:%s620]
                  %694 = vst [vmem:[%s628 + $0x400] sm:%s620] %v693
                  %v695 = vld [vmem:[%s627 + $0x528] sm:%s620]
                  %696 = vst [vmem:[%s628 + $0x420] sm:%s620] %v695
                  %v697 = vld [vmem:[%s627 + $0x550] sm:%s620]
                  %698 = vst [vmem:[%s628 + $0x440] sm:%s620] %v697
                  %v699 = vld [vmem:[%s627 + $0x578] sm:%s620]
                  %700 = vst [vmem:[%s628 + $0x460] sm:%s620] %v699
                  %v701 = vld [vmem:[%s627 + $0x5a0] sm:%s620]
                  %702 = vst [vmem:[%s628 + $0x480] sm:%s620] %v701
                  %v703 = vld [vmem:[%s627 + $0x5c8] sm:%s620]
                  %704 = vst [vmem:[%s628 + $0x4a0] sm:%s620] %v703
                  %v705 = vld [vmem:[%s627 + $0x5f0] sm:%s620]
                  %706 = vst [vmem:[%s628 + $0x4c0] sm:%s620] %v705
                  %v707 = vld [vmem:[%s627 + $0x618] sm:%s620]
                  %708 = vst [vmem:[%s628 + $0x4e0] sm:%s620] %v707
                  %v709 = vld [vmem:[%s627 + $0x640] sm:%s620]
                  %710 = vst [vmem:[%s628 + $0x500] sm:%s620] %v709
                  %v711 = vld [vmem:[%s627 + $0x668] sm:%s620]
                  %712 = vst [vmem:[%s628 + $0x520] sm:%s620] %v711
                  %v713 = vld [vmem:[%s627 + $0x690] sm:%s620]
                  %714 = vst [vmem:[%s628 + $0x540] sm:%s620] %v713
                  %v715 = vld [vmem:[%s627 + $0x6b8] sm:%s620]
                  %716 = vst [vmem:[%s628 + $0x560] sm:%s620] %v715
                  %v717 = vld [vmem:[%s627 + $0x6e0] sm:%s620]
                  %718 = vst [vmem:[%s628 + $0x580] sm:%s620] %v717
                  %v719 = vld [vmem:[%s627 + $0x708] sm:%s620]
                  %720 = vst [vmem:[%s628 + $0x5a0] sm:%s620] %v719
                  %v721 = vld [vmem:[%s627 + $0x730] sm:%s620]
                  %722 = vst [vmem:[%s628 + $0x5c0] sm:%s620] %v721
                  %v723 = vld [vmem:[%s627 + $0x758] sm:%s620]
                  %724 = vst [vmem:[%s628 + $0x5e0] sm:%s620] %v723
                  %v725 = vld [vmem:[%s627 + $0x780] sm:%s620]
                  %726 = vst [vmem:[%s628 + $0x600] sm:%s620] %v725
                  %v727 = vld [vmem:[%s627 + $0x7a8] sm:%s620]
                  %728 = vst [vmem:[%s628 + $0x620] sm:%s620] %v727
                  %v729 = vld [vmem:[%s627 + $0x7d0] sm:%s620]
                  %730 = vst [vmem:[%s628 + $0x640] sm:%s620] %v729
                  %v731 = vld [vmem:[%s627 + $0x7f8] sm:%s620]
                  %732 = vst [vmem:[%s628 + $0x660] sm:%s620] %v731
                  %v733 = vld [vmem:[%s627 + $0x820] sm:%s620]
                  %734 = vst [vmem:[%s628 + $0x680] sm:%s620] %v733
                  %v735 = vld [vmem:[%s627 + $0x848] sm:%s620]
                  %736 = vst [vmem:[%s628 + $0x6a0] sm:%s620] %v735
                  %v737 = vld [vmem:[%s627 + $0x870] sm:%s620]
                  %738 = vst [vmem:[%s628 + $0x6c0] sm:%s620] %v737
                  %v739 = vld [vmem:[%s627 + $0x898] sm:%s620]
                  %740 = vst [vmem:[%s628 + $0x6e0] sm:%s620] %v739
                  %v741 = vld [vmem:[%s627 + $0x8c0] sm:%s620]
                  %742 = vst [vmem:[%s628 + $0x700] sm:%s620] %v741
                  %v743 = vld [vmem:[%s627 + $0x8e8] sm:%s620]
                  %744 = vst [vmem:[%s628 + $0x720] sm:%s620] %v743
                  %v745 = vld [vmem:[%s627 + $0x910] sm:%s620]
                  %746 = vst [vmem:[%s628 + $0x740] sm:%s620] %v745
                  %v747 = vld [vmem:[%s627 + $0x938] sm:%s620]
                  %748 = vst [vmem:[%s628 + $0x760] sm:%s620] %v747
                  %v749 = vld [vmem:[%s627 + $0x960] sm:%s620]
                  %750 = vst [vmem:[%s628 + $0x780] sm:%s620] %v749
                  %v751 = vld [vmem:[%s627 + $0x988] sm:%s620]
                  %752 = vst [vmem:[%s628 + $0x7a0] sm:%s620] %v751
                  %v753 = vld [vmem:[%s627 + $0x9b0] sm:%s620]
                  %754 = vst [vmem:[%s628 + $0x7c0] sm:%s620] %v753
                  %v755 = vld [vmem:[%s627 + $0x9d8] sm:%s620]
                  %756 = vst [vmem:[%s628 + $0x7e0] sm:%s620] %v755
                $region74: #{_proj_head_single.1} parent=61 // loop_footer
                  %s626 = sadd.s32 1, %s622
                $region75: #{_proj_head_single.1} parent=61 // loop_footer_branch
                  %621 = sbr.rel target = $region71
                $region76: #{_proj_head_single.1} parent=61 // loop_exit
                  _
              $region62: #{_proj_head_single.1} parent=35 // pred_fallthru
                _
            $region36: #{_proj_head_single.1} parent=31 // pred_fallthru
              _
            // Predicated region
            $region37: #{_proj_head_single.1} parent=31 // pred_check
              %p171 = pneg %p167
            $region38: #{_proj_head_single.1} parent=31 // pred_check_branch
              %173 = sbr.rel (%p171) target = $region40
            $region39: #{_proj_head_single.1} parent=31 // pred_region
              %s174 = sshll.u32 1, %s163
              %s175 = ssub.s32 %s174, 1
              loop: start=0, step=1, limit=1
              $region41: #{_proj_head_single.1} parent=39 // loop_pre_header
                _
              $region42: #{_proj_head_single.1} parent=39 // loop_header
                %s177 = sphi 0, %s181
                %p178 = scmp.ge.s32.totalorder %s177, 1
                %s182 = sphi %s162, %s162
                %s183 = sphi %s151, %s151
              $region43: #{_proj_head_single.1} parent=39 // loop_header_branch
                %180 = sbr.rel (%p178) target = $region47
              $region44: #{_proj_head_single.1} parent=39 // loop_body
                %v184 = vld [vmem:[%s182] sm:%s175]
                %185 = vst [vmem:[%s183] sm:%s175] %v184
                %v186 = vld [vmem:[%s182 + $0x28] sm:%s175]
                %187 = vst [vmem:[%s183 + $0x20] sm:%s175] %v186
                %v188 = vld [vmem:[%s182 + $0x50] sm:%s175]
                %189 = vst [vmem:[%s183 + $0x40] sm:%s175] %v188
                %v190 = vld [vmem:[%s182 + $0x78] sm:%s175]
                %191 = vst [vmem:[%s183 + $0x60] sm:%s175] %v190
                %v192 = vld [vmem:[%s182 + $0xa0] sm:%s175]
                %193 = vst [vmem:[%s183 + $0x80] sm:%s175] %v192
                %v194 = vld [vmem:[%s182 + $0xc8] sm:%s175]
                %195 = vst [vmem:[%s183 + $0xa0] sm:%s175] %v194
                %v196 = vld [vmem:[%s182 + $0xf0] sm:%s175]
                %197 = vst [vmem:[%s183 + $0xc0] sm:%s175] %v196
                %v198 = vld [vmem:[%s182 + $0x118] sm:%s175]
                %199 = vst [vmem:[%s183 + $0xe0] sm:%s175] %v198
                %v200 = vld [vmem:[%s182 + $0x140] sm:%s175]
                %201 = vst [vmem:[%s183 + $0x100] sm:%s175] %v200
                %v202 = vld [vmem:[%s182 + $0x168] sm:%s175]
                %203 = vst [vmem:[%s183 + $0x120] sm:%s175] %v202
                %v204 = vld [vmem:[%s182 + $0x190] sm:%s175]
                %205 = vst [vmem:[%s183 + $0x140] sm:%s175] %v204
                %v206 = vld [vmem:[%s182 + $0x1b8] sm:%s175]
                %207 = vst [vmem:[%s183 + $0x160] sm:%s175] %v206
                %v208 = vld [vmem:[%s182 + $0x1e0] sm:%s175]
                %209 = vst [vmem:[%s183 + $0x180] sm:%s175] %v208
                %v210 = vld [vmem:[%s182 + $0x208] sm:%s175]
                %211 = vst [vmem:[%s183 + $0x1a0] sm:%s175] %v210
                %v212 = vld [vmem:[%s182 + $0x230] sm:%s175]
                %213 = vst [vmem:[%s183 + $0x1c0] sm:%s175] %v212
                %v214 = vld [vmem:[%s182 + $0x258] sm:%s175]
                %215 = vst [vmem:[%s183 + $0x1e0] sm:%s175] %v214
                %v216 = vld [vmem:[%s182 + $0x280] sm:%s175]
                %217 = vst [vmem:[%s183 + $0x200] sm:%s175] %v216
                %v218 = vld [vmem:[%s182 + $0x2a8] sm:%s175]
                %219 = vst [vmem:[%s183 + $0x220] sm:%s175] %v218
                %v220 = vld [vmem:[%s182 + $0x2d0] sm:%s175]
                %221 = vst [vmem:[%s183 + $0x240] sm:%s175] %v220
                %v222 = vld [vmem:[%s182 + $0x2f8] sm:%s175]
                %223 = vst [vmem:[%s183 + $0x260] sm:%s175] %v222
                %v224 = vld [vmem:[%s182 + $0x320] sm:%s175]
                %225 = vst [vmem:[%s183 + $0x280] sm:%s175] %v224
                %v226 = vld [vmem:[%s182 + $0x348] sm:%s175]
                %227 = vst [vmem:[%s183 + $0x2a0] sm:%s175] %v226
                %v228 = vld [vmem:[%s182 + $0x370] sm:%s175]
                %229 = vst [vmem:[%s183 + $0x2c0] sm:%s175] %v228
                %v230 = vld [vmem:[%s182 + $0x398] sm:%s175]
                %231 = vst [vmem:[%s183 + $0x2e0] sm:%s175] %v230
                %v232 = vld [vmem:[%s182 + $0x3c0] sm:%s175]
                %233 = vst [vmem:[%s183 + $0x300] sm:%s175] %v232
                %v234 = vld [vmem:[%s182 + $0x3e8] sm:%s175]
                %235 = vst [vmem:[%s183 + $0x320] sm:%s175] %v234
                %v236 = vld [vmem:[%s182 + $0x410] sm:%s175]
                %237 = vst [vmem:[%s183 + $0x340] sm:%s175] %v236
                %v238 = vld [vmem:[%s182 + $0x438] sm:%s175]
                %239 = vst [vmem:[%s183 + $0x360] sm:%s175] %v238
                %v240 = vld [vmem:[%s182 + $0x460] sm:%s175]
                %241 = vst [vmem:[%s183 + $0x380] sm:%s175] %v240
                %v242 = vld [vmem:[%s182 + $0x488] sm:%s175]
                %243 = vst [vmem:[%s183 + $0x3a0] sm:%s175] %v242
                %v244 = vld [vmem:[%s182 + $0x4b0] sm:%s175]
                %245 = vst [vmem:[%s183 + $0x3c0] sm:%s175] %v244
                %v246 = vld [vmem:[%s182 + $0x4d8] sm:%s175]
                %247 = vst [vmem:[%s183 + $0x3e0] sm:%s175] %v246
                %v248 = vld [vmem:[%s182 + $0x500] sm:%s175]
                %249 = vst [vmem:[%s183 + $0x400] sm:%s175] %v248
                %v250 = vld [vmem:[%s182 + $0x528] sm:%s175]
                %251 = vst [vmem:[%s183 + $0x420] sm:%s175] %v250
                %v252 = vld [vmem:[%s182 + $0x550] sm:%s175]
                %253 = vst [vmem:[%s183 + $0x440] sm:%s175] %v252
                %v254 = vld [vmem:[%s182 + $0x578] sm:%s175]
                %255 = vst [vmem:[%s183 + $0x460] sm:%s175] %v254
                %v256 = vld [vmem:[%s182 + $0x5a0] sm:%s175]
                %257 = vst [vmem:[%s183 + $0x480] sm:%s175] %v256
                %v258 = vld [vmem:[%s182 + $0x5c8] sm:%s175]
                %259 = vst [vmem:[%s183 + $0x4a0] sm:%s175] %v258
                %v260 = vld [vmem:[%s182 + $0x5f0] sm:%s175]
                %261 = vst [vmem:[%s183 + $0x4c0] sm:%s175] %v260
                %v262 = vld [vmem:[%s182 + $0x618] sm:%s175]
                %263 = vst [vmem:[%s183 + $0x4e0] sm:%s175] %v262
                %v264 = vld [vmem:[%s182 + $0x640] sm:%s175]
                %265 = vst [vmem:[%s183 + $0x500] sm:%s175] %v264
                %v266 = vld [vmem:[%s182 + $0x668] sm:%s175]
                %267 = vst [vmem:[%s183 + $0x520] sm:%s175] %v266
                %v268 = vld [vmem:[%s182 + $0x690] sm:%s175]
                %269 = vst [vmem:[%s183 + $0x540] sm:%s175] %v268
                %v270 = vld [vmem:[%s182 + $0x6b8] sm:%s175]
                %271 = vst [vmem:[%s183 + $0x560] sm:%s175] %v270
                %v272 = vld [vmem:[%s182 + $0x6e0] sm:%s175]
                %273 = vst [vmem:[%s183 + $0x580] sm:%s175] %v272
                %v274 = vld [vmem:[%s182 + $0x708] sm:%s175]
                %275 = vst [vmem:[%s183 + $0x5a0] sm:%s175] %v274
                %v276 = vld [vmem:[%s182 + $0x730] sm:%s175]
                %277 = vst [vmem:[%s183 + $0x5c0] sm:%s175] %v276
                %v278 = vld [vmem:[%s182 + $0x758] sm:%s175]
                %279 = vst [vmem:[%s183 + $0x5e0] sm:%s175] %v278
                %v280 = vld [vmem:[%s182 + $0x780] sm:%s175]
                %281 = vst [vmem:[%s183 + $0x600] sm:%s175] %v280
                %v282 = vld [vmem:[%s182 + $0x7a8] sm:%s175]
                %283 = vst [vmem:[%s183 + $0x620] sm:%s175] %v282
                %v284 = vld [vmem:[%s182 + $0x7d0] sm:%s175]
                %285 = vst [vmem:[%s183 + $0x640] sm:%s175] %v284
                %v286 = vld [vmem:[%s182 + $0x7f8] sm:%s175]
                %287 = vst [vmem:[%s183 + $0x660] sm:%s175] %v286
                %v288 = vld [vmem:[%s182 + $0x820] sm:%s175]
                %289 = vst [vmem:[%s183 + $0x680] sm:%s175] %v288
                %v290 = vld [vmem:[%s182 + $0x848] sm:%s175]
                %291 = vst [vmem:[%s183 + $0x6a0] sm:%s175] %v290
                %v292 = vld [vmem:[%s182 + $0x870] sm:%s175]
                %293 = vst [vmem:[%s183 + $0x6c0] sm:%s175] %v292
                %v294 = vld [vmem:[%s182 + $0x898] sm:%s175]
                %295 = vst [vmem:[%s183 + $0x6e0] sm:%s175] %v294
                %v296 = vld [vmem:[%s182 + $0x8c0] sm:%s175]
                %297 = vst [vmem:[%s183 + $0x700] sm:%s175] %v296
                %v298 = vld [vmem:[%s182 + $0x8e8] sm:%s175]
                %299 = vst [vmem:[%s183 + $0x720] sm:%s175] %v298
                %v300 = vld [vmem:[%s182 + $0x910] sm:%s175]
                %301 = vst [vmem:[%s183 + $0x740] sm:%s175] %v300
                %v302 = vld [vmem:[%s182 + $0x938] sm:%s175]
                %303 = vst [vmem:[%s183 + $0x760] sm:%s175] %v302
                %v304 = vld [vmem:[%s182 + $0x960] sm:%s175]
                %305 = vst [vmem:[%s183 + $0x780] sm:%s175] %v304
                %v306 = vld [vmem:[%s182 + $0x988] sm:%s175]
                %307 = vst [vmem:[%s183 + $0x7a0] sm:%s175] %v306
                %v308 = vld [vmem:[%s182 + $0x9b0] sm:%s175]
                %309 = vst [vmem:[%s183 + $0x7c0] sm:%s175] %v308
                %v310 = vld [vmem:[%s182 + $0x9d8] sm:%s175]
                %311 = vst [vmem:[%s183 + $0x7e0] sm:%s175] %v310
              $region45: #{_proj_head_single.1} parent=39 // loop_footer
                %s181 = sadd.s32 1, %s177
              $region46: #{_proj_head_single.1} parent=39 // loop_footer_branch
                %176 = sbr.rel target = $region42
              $region47: #{_proj_head_single.1} parent=39 // loop_exit
                _
            $region40: #{_proj_head_single.1} parent=31 // pred_fallthru
              _
          $region32: #{_proj_head_single.1} parent=27 // pred_fallthru
            _
          %757 = vnop
        $region28: #{_proj_head_single.1} parent=23 // pred_fallthru
          _
      $region24: #{_proj_head_single.1} parent=5 // pred_fallthru
        _
      %p758 = scmp.le.s32.totalorder 1, %s12
      %p759 = scmp.lt.s32.totalorder %s12, 5
      %p760 = pnand %p758, %p759
      %p761 = pneg %p760
      // Predicated region
      $region77: #{_proj_head_single.1} parent=5 // pred_check
        _
      $region78: #{_proj_head_single.1} parent=5 // pred_check_branch
        %763 = sbr.rel (%p760) target = $region80
      $region79: #{_proj_head_single.1} parent=5 // pred_region
        %s764 = ssub.s32 %s12, 1
        %s765 = sand.u32 %s39, 1
        %s766 = sand.u32 %s39, 1
        %s767 = smul.addr %s766, 2048
        %s768 = scalar_lea.vmem [#allocation3], %s767
        // Predicated region
        $region81: #{_proj_head_single.1} parent=79 // pred_check
          %p769 = pneg %p52
        $region82: #{_proj_head_single.1} parent=79 // pred_check_branch
          %771 = sbr.rel (%p769) target = $region84
        $region83: #{_proj_head_single.1} parent=79 // pred_region
          _
        $region84: #{_proj_head_single.1} parent=79 // pred_fallthru
          _
        %s772 = sand.u32 %s39, 1
        %s773 = sand.u32 %s39, 1
        %s774 = smul.addr %s773, 2048
        %s775 = scalar_lea.vmem [#allocation3], %s774
        %p776 = pneg %p52
        %p777 = pneg %p49
        %p778 = pneg %p73
        %p779 = pneg %p70
        %p780 = pneg %p94
        %p781 = pneg %p91
        %p782 = pneg %p120
        %p783 = pneg %p117
        %s784 = sand.u32 %s107, 1
        %s785 = scalar_lea.sflag [#allocation5], %s784
        %s786 = sand.u32 %s107, 1
        %s787 = smul.addr %s786, 2
        %s788 = scalar_lea.vmem [#allocation4], %s787
        %s789 = smul.u32 2, %s21
        %s790 = smul.u32 4, %s22
        %s791 = ssub.s32 5, %s790
        %p792 = scmp.lt.s32.totalorder %s791, 4
        %s793 = scalar_select %p792, %s791, 4
        %s794 = smul.u32 8192, %s793
        %p795 = scmp.eq.s32.totalorder %s22, 0
        // Predicated region
        $region85: #{_proj_head_single.1} parent=79 // pred_check
          %p796 = pneg %p795
        $region86: #{_proj_head_single.1} parent=79 // pred_check_branch
          %798 = sbr.rel (%p796) target = $region88
        $region87: #{_proj_head_single.1} parent=79 // pred_region
          %799 = vst [vmem:[#allocation2] sm:$0xff] 0.0
          %800 = vst [vmem:[#allocation2 + $0x8] sm:$0xff] 0.0
          %801 = vst [vmem:[#allocation2 + $0x10] sm:$0xff] 0.0
          %802 = vst [vmem:[#allocation2 + $0x18] sm:$0xff] 0.0
          %803 = vst [vmem:[#allocation2 + $0x20] sm:$0xff] 0.0
          %804 = vst [vmem:[#allocation2 + $0x28] sm:$0xff] 0.0
          %805 = vst [vmem:[#allocation2 + $0x30] sm:$0xff] 0.0
          %806 = vst [vmem:[#allocation2 + $0x38] sm:$0xff] 0.0
          %807 = vst [vmem:[#allocation2 + $0x40] sm:$0xff] 0.0
          %808 = vst [vmem:[#allocation2 + $0x48] sm:$0xff] 0.0
          %809 = vst [vmem:[#allocation2 + $0x50] sm:$0xff] 0.0
          %810 = vst [vmem:[#allocation2 + $0x58] sm:$0xff] 0.0
          %811 = vst [vmem:[#allocation2 + $0x60] sm:$0xff] 0.0
          %812 = vst [vmem:[#allocation2 + $0x68] sm:$0xff] 0.0
          %813 = vst [vmem:[#allocation2 + $0x70] sm:$0xff] 0.0
          %814 = vst [vmem:[#allocation2 + $0x78] sm:$0xff] 0.0
          %815 = vst [vmem:[#allocation2 + $0x80] sm:$0xff] 0.0
          %816 = vst [vmem:[#allocation2 + $0x88] sm:$0xff] 0.0
          %817 = vst [vmem:[#allocation2 + $0x90] sm:$0xff] 0.0
          %818 = vst [vmem:[#allocation2 + $0x98] sm:$0xff] 0.0
          %819 = vst [vmem:[#allocation2 + $0xa0] sm:$0xff] 0.0
          %820 = vst [vmem:[#allocation2 + $0xa8] sm:$0xff] 0.0
          %821 = vst [vmem:[#allocation2 + $0xb0] sm:$0xff] 0.0
          %822 = vst [vmem:[#allocation2 + $0xb8] sm:$0xff] 0.0
          %823 = vst [vmem:[#allocation2 + $0xc0] sm:$0xff] 0.0
          %824 = vst [vmem:[#allocation2 + $0xc8] sm:$0xff] 0.0
          %825 = vst [vmem:[#allocation2 + $0xd0] sm:$0xff] 0.0
          %826 = vst [vmem:[#allocation2 + $0xd8] sm:$0xff] 0.0
          %827 = vst [vmem:[#allocation2 + $0xe0] sm:$0xff] 0.0
          %828 = vst [vmem:[#allocation2 + $0xe8] sm:$0xff] 0.0
          %829 = vst [vmem:[#allocation2 + $0xf0] sm:$0xff] 0.0
          %830 = vst [vmem:[#allocation2 + $0xf8] sm:$0xff] 0.0
          %831 = vst [vmem:[#allocation2 + $0x100] sm:$0xff] 0.0
          %832 = vst [vmem:[#allocation2 + $0x108] sm:$0xff] 0.0
          %833 = vst [vmem:[#allocation2 + $0x110] sm:$0xff] 0.0
          %834 = vst [vmem:[#allocation2 + $0x118] sm:$0xff] 0.0
          %835 = vst [vmem:[#allocation2 + $0x120] sm:$0xff] 0.0
          %836 = vst [vmem:[#allocation2 + $0x128] sm:$0xff] 0.0
          %837 = vst [vmem:[#allocation2 + $0x130] sm:$0xff] 0.0
          %838 = vst [vmem:[#allocation2 + $0x138] sm:$0xff] 0.0
          %839 = vst [vmem:[#allocation2 + $0x140] sm:$0xff] 0.0
          %840 = vst [vmem:[#allocation2 + $0x148] sm:$0xff] 0.0
          %841 = vst [vmem:[#allocation2 + $0x150] sm:$0xff] 0.0
          %842 = vst [vmem:[#allocation2 + $0x158] sm:$0xff] 0.0
          %843 = vst [vmem:[#allocation2 + $0x160] sm:$0xff] 0.0
          %844 = vst [vmem:[#allocation2 + $0x168] sm:$0xff] 0.0
          %845 = vst [vmem:[#allocation2 + $0x170] sm:$0xff] 0.0
          %846 = vst [vmem:[#allocation2 + $0x178] sm:$0xff] 0.0
          %847 = vst [vmem:[#allocation2 + $0x180] sm:$0xff] 0.0
          %848 = vst [vmem:[#allocation2 + $0x188] sm:$0xff] 0.0
          %849 = vst [vmem:[#allocation2 + $0x190] sm:$0xff] 0.0
          %850 = vst [vmem:[#allocation2 + $0x198] sm:$0xff] 0.0
          %851 = vst [vmem:[#allocation2 + $0x1a0] sm:$0xff] 0.0
          %852 = vst [vmem:[#allocation2 + $0x1a8] sm:$0xff] 0.0
          %853 = vst [vmem:[#allocation2 + $0x1b0] sm:$0xff] 0.0
          %854 = vst [vmem:[#allocation2 + $0x1b8] sm:$0xff] 0.0
          %855 = vst [vmem:[#allocation2 + $0x1c0] sm:$0xff] 0.0
          %856 = vst [vmem:[#allocation2 + $0x1c8] sm:$0xff] 0.0
          %857 = vst [vmem:[#allocation2 + $0x1d0] sm:$0xff] 0.0
          %858 = vst [vmem:[#allocation2 + $0x1d8] sm:$0xff] 0.0
          %859 = vst [vmem:[#allocation2 + $0x1e0] sm:$0xff] 0.0
          %860 = vst [vmem:[#allocation2 + $0x1e8] sm:$0xff] 0.0
          %861 = vst [vmem:[#allocation2 + $0x1f0] sm:$0xff] 0.0
          %862 = vst [vmem:[#allocation2 + $0x1f8] sm:$0xff] 0.0
        $region88: #{_proj_head_single.1} parent=79 // pred_fallthru
          _
        %v863 = vld [vmem:[%s768] sm:$0xff]
        %v864 = vld [vmem:[%s768 + $0x8] sm:$0xff]
        %v865 = vld [vmem:[%s768 + $0x10] sm:$0xff]
        %v866 = vld [vmem:[%s768 + $0x18] sm:$0xff]
        %v867 = vld [vmem:[%s768 + $0x20] sm:$0xff]
        %v868 = vld [vmem:[%s768 + $0x28] sm:$0xff]
        %v869 = vld [vmem:[%s768 + $0x30] sm:$0xff]
        %v870 = vld [vmem:[%s768 + $0x38] sm:$0xff]
        %v871 = vld [vmem:[%s768 + $0x40] sm:$0xff]
        %v872 = vld [vmem:[%s768 + $0x48] sm:$0xff]
        %v873 = vld [vmem:[%s768 + $0x50] sm:$0xff]
        %v874 = vld [vmem:[%s768 + $0x58] sm:$0xff]
        %v875 = vld [vmem:[%s768 + $0x60] sm:$0xff]
        %v876 = vld [vmem:[%s768 + $0x68] sm:$0xff]
        %v877 = vld [vmem:[%s768 + $0x70] sm:$0xff]
        %v878 = vld [vmem:[%s768 + $0x78] sm:$0xff]
        %v879 = vld [vmem:[%s768 + $0x80] sm:$0xff]
        %v880 = vld [vmem:[%s768 + $0x88] sm:$0xff]
        %v881 = vld [vmem:[%s768 + $0x90] sm:$0xff]
        %v882 = vld [vmem:[%s768 + $0x98] sm:$0xff]
        %v883 = vld [vmem:[%s768 + $0xa0] sm:$0xff]
        %v884 = vld [vmem:[%s768 + $0xa8] sm:$0xff]
        %v885 = vld [vmem:[%s768 + $0xb0] sm:$0xff]
        %v886 = vld [vmem:[%s768 + $0xb8] sm:$0xff]
        %v887 = vld [vmem:[%s768 + $0xc0] sm:$0xff]
        %v888 = vld [vmem:[%s768 + $0xc8] sm:$0xff]
        %v889 = vld [vmem:[%s768 + $0xd0] sm:$0xff]
        %v890 = vld [vmem:[%s768 + $0xd8] sm:$0xff]
        %v891 = vld [vmem:[%s768 + $0xe0] sm:$0xff]
        %v892 = vld [vmem:[%s768 + $0xe8] sm:$0xff]
        %v893 = vld [vmem:[%s768 + $0xf0] sm:$0xff]
        %v894 = vld [vmem:[%s768 + $0xf8] sm:$0xff]
        %v895 = vld [vmem:[%s768 + $0x100] sm:$0xff]
        %v896 = vld [vmem:[%s768 + $0x108] sm:$0xff]
        %v897 = vld [vmem:[%s768 + $0x110] sm:$0xff]
        %v898 = vld [vmem:[%s768 + $0x118] sm:$0xff]
        %v899 = vld [vmem:[%s768 + $0x120] sm:$0xff]
        %v900 = vld [vmem:[%s768 + $0x128] sm:$0xff]
        %v901 = vld [vmem:[%s768 + $0x130] sm:$0xff]
        %v902 = vld [vmem:[%s768 + $0x138] sm:$0xff]
        %v903 = vld [vmem:[%s768 + $0x140] sm:$0xff]
        %v904 = vld [vmem:[%s768 + $0x148] sm:$0xff]
        %v905 = vld [vmem:[%s768 + $0x150] sm:$0xff]
        %v906 = vld [vmem:[%s768 + $0x158] sm:$0xff]
        %v907 = vld [vmem:[%s768 + $0x160] sm:$0xff]
        %v908 = vld [vmem:[%s768 + $0x168] sm:$0xff]
        %v909 = vld [vmem:[%s768 + $0x170] sm:$0xff]
        %v910 = vld [vmem:[%s768 + $0x178] sm:$0xff]
        %v911 = vld [vmem:[%s768 + $0x180] sm:$0xff]
        %v912 = vld [vmem:[%s768 + $0x188] sm:$0xff]
        %v913 = vld [vmem:[%s768 + $0x190] sm:$0xff]
        %v914 = vld [vmem:[%s768 + $0x198] sm:$0xff]
        %v915 = vld [vmem:[%s768 + $0x1a0] sm:$0xff]
        %v916 = vld [vmem:[%s768 + $0x1a8] sm:$0xff]
        %v917 = vld [vmem:[%s768 + $0x1b0] sm:$0xff]
        %v918 = vld [vmem:[%s768 + $0x1b8] sm:$0xff]
        %v919 = vld [vmem:[%s768 + $0x1c0] sm:$0xff]
        %v920 = vld [vmem:[%s768 + $0x1c8] sm:$0xff]
        %v921 = vld [vmem:[%s768 + $0x1d0] sm:$0xff]
        %v922 = vld [vmem:[%s768 + $0x1d8] sm:$0xff]
        %v923 = vld [vmem:[%s768 + $0x1e0] sm:$0xff]
        %v924 = vld [vmem:[%s768 + $0x1e8] sm:$0xff]
        %v925 = vld [vmem:[%s768 + $0x1f0] sm:$0xff]
        %v926 = vld [vmem:[%s768 + $0x1f8] sm:$0xff]
        %v927 = vld [vmem:[%s768 + $0x200] sm:$0xff]
        %v928 = vld [vmem:[%s768 + $0x208] sm:$0xff]
        %v929 = vld [vmem:[%s768 + $0x210] sm:$0xff]
        %v930 = vld [vmem:[%s768 + $0x218] sm:$0xff]
        %v931 = vld [vmem:[%s768 + $0x220] sm:$0xff]
        %v932 = vld [vmem:[%s768 + $0x228] sm:$0xff]
        %v933 = vld [vmem:[%s768 + $0x230] sm:$0xff]
        %v934 = vld [vmem:[%s768 + $0x238] sm:$0xff]
        %v935 = vld [vmem:[%s768 + $0x240] sm:$0xff]
        %v936 = vld [vmem:[%s768 + $0x248] sm:$0xff]
        %v937 = vld [vmem:[%s768 + $0x250] sm:$0xff]
        %v938 = vld [vmem:[%s768 + $0x258] sm:$0xff]
        %v939 = vld [vmem:[%s768 + $0x260] sm:$0xff]
        %v940 = vld [vmem:[%s768 + $0x268] sm:$0xff]
        %v941 = vld [vmem:[%s768 + $0x270] sm:$0xff]
        %v942 = vld [vmem:[%s768 + $0x278] sm:$0xff]
        %v943 = vld [vmem:[%s768 + $0x280] sm:$0xff]
        %v944 = vld [vmem:[%s768 + $0x288] sm:$0xff]
        %v945 = vld [vmem:[%s768 + $0x290] sm:$0xff]
        %v946 = vld [vmem:[%s768 + $0x298] sm:$0xff]
        %v947 = vld [vmem:[%s768 + $0x2a0] sm:$0xff]
        %v948 = vld [vmem:[%s768 + $0x2a8] sm:$0xff]
        %v949 = vld [vmem:[%s768 + $0x2b0] sm:$0xff]
        %v950 = vld [vmem:[%s768 + $0x2b8] sm:$0xff]
        %v951 = vld [vmem:[%s768 + $0x2c0] sm:$0xff]
        %v952 = vld [vmem:[%s768 + $0x2c8] sm:$0xff]
        %v953 = vld [vmem:[%s768 + $0x2d0] sm:$0xff]
        %v954 = vld [vmem:[%s768 + $0x2d8] sm:$0xff]
        %v955 = vld [vmem:[%s768 + $0x2e0] sm:$0xff]
        %v956 = vld [vmem:[%s768 + $0x2e8] sm:$0xff]
        %v957 = vld [vmem:[%s768 + $0x2f0] sm:$0xff]
        %v958 = vld [vmem:[%s768 + $0x2f8] sm:$0xff]
        %v959 = vld [vmem:[%s768 + $0x300] sm:$0xff]
        %v960 = vld [vmem:[%s768 + $0x308] sm:$0xff]
        %v961 = vld [vmem:[%s768 + $0x310] sm:$0xff]
        %v962 = vld [vmem:[%s768 + $0x318] sm:$0xff]
        %v963 = vld [vmem:[%s768 + $0x320] sm:$0xff]
        %v964 = vld [vmem:[%s768 + $0x328] sm:$0xff]
        %v965 = vld [vmem:[%s768 + $0x330] sm:$0xff]
        %v966 = vld [vmem:[%s768 + $0x338] sm:$0xff]
        %v967 = vld [vmem:[%s768 + $0x340] sm:$0xff]
        %v968 = vld [vmem:[%s768 + $0x348] sm:$0xff]
        %v969 = vld [vmem:[%s768 + $0x350] sm:$0xff]
        %v970 = vld [vmem:[%s768 + $0x358] sm:$0xff]
        %v971 = vld [vmem:[%s768 + $0x360] sm:$0xff]
        %v972 = vld [vmem:[%s768 + $0x368] sm:$0xff]
        %v973 = vld [vmem:[%s768 + $0x370] sm:$0xff]
        %v974 = vld [vmem:[%s768 + $0x378] sm:$0xff]
        %v975 = vld [vmem:[%s768 + $0x380] sm:$0xff]
        %v976 = vld [vmem:[%s768 + $0x388] sm:$0xff]
        %v977 = vld [vmem:[%s768 + $0x390] sm:$0xff]
        %v978 = vld [vmem:[%s768 + $0x398] sm:$0xff]
        %v979 = vld [vmem:[%s768 + $0x3a0] sm:$0xff]
        %v980 = vld [vmem:[%s768 + $0x3a8] sm:$0xff]
        %v981 = vld [vmem:[%s768 + $0x3b0] sm:$0xff]
        %v982 = vld [vmem:[%s768 + $0x3b8] sm:$0xff]
        %v983 = vld [vmem:[%s768 + $0x3c0] sm:$0xff]
        %v984 = vld [vmem:[%s768 + $0x3c8] sm:$0xff]
        %v985 = vld [vmem:[%s768 + $0x3d0] sm:$0xff]
        %v986 = vld [vmem:[%s768 + $0x3d8] sm:$0xff]
        %v987 = vld [vmem:[%s768 + $0x3e0] sm:$0xff]
        %v988 = vld [vmem:[%s768 + $0x3e8] sm:$0xff]
        %v989 = vld [vmem:[%s768 + $0x3f0] sm:$0xff]
        %v990 = vld [vmem:[%s768 + $0x3f8] sm:$0xff]
        %v991 = vld [vmem:[%s768 + $0x400] sm:$0xff]
        %v992 = vld [vmem:[%s768 + $0x408] sm:$0xff]
        %v993 = vld [vmem:[%s768 + $0x410] sm:$0xff]
        %v994 = vld [vmem:[%s768 + $0x418] sm:$0xff]
        %v995 = vld [vmem:[%s768 + $0x420] sm:$0xff]
        %v996 = vld [vmem:[%s768 + $0x428] sm:$0xff]
        %v997 = vld [vmem:[%s768 + $0x430] sm:$0xff]
        %v998 = vld [vmem:[%s768 + $0x438] sm:$0xff]
        %v999 = vld [vmem:[%s768 + $0x440] sm:$0xff]
        %v1000 = vld [vmem:[%s768 + $0x448] sm:$0xff]
        %v1001 = vld [vmem:[%s768 + $0x450] sm:$0xff]
        %v1002 = vld [vmem:[%s768 + $0x458] sm:$0xff]
        %v1003 = vld [vmem:[%s768 + $0x460] sm:$0xff]
        %v1004 = vld [vmem:[%s768 + $0x468] sm:$0xff]
        %v1005 = vld [vmem:[%s768 + $0x470] sm:$0xff]
        %v1006 = vld [vmem:[%s768 + $0x478] sm:$0xff]
        %v1007 = vld [vmem:[%s768 + $0x480] sm:$0xff]
        %v1008 = vld [vmem:[%s768 + $0x488] sm:$0xff]
        %v1009 = vld [vmem:[%s768 + $0x490] sm:$0xff]
        %v1010 = vld [vmem:[%s768 + $0x498] sm:$0xff]
        %v1011 = vld [vmem:[%s768 + $0x4a0] sm:$0xff]
        %v1012 = vld [vmem:[%s768 + $0x4a8] sm:$0xff]
        %v1013 = vld [vmem:[%s768 + $0x4b0] sm:$0xff]
        %v1014 = vld [vmem:[%s768 + $0x4b8] sm:$0xff]
        %v1015 = vld [vmem:[%s768 + $0x4c0] sm:$0xff]
        %v1016 = vld [vmem:[%s768 + $0x4c8] sm:$0xff]
        %v1017 = vld [vmem:[%s768 + $0x4d0] sm:$0xff]
        %v1018 = vld [vmem:[%s768 + $0x4d8] sm:$0xff]
        %v1019 = vld [vmem:[%s768 + $0x4e0] sm:$0xff]
        %v1020 = vld [vmem:[%s768 + $0x4e8] sm:$0xff]
        %v1021 = vld [vmem:[%s768 + $0x4f0] sm:$0xff]
        %v1022 = vld [vmem:[%s768 + $0x4f8] sm:$0xff]
        %v1023 = vld [vmem:[%s768 + $0x500] sm:$0xff]
        %v1024 = vld [vmem:[%s768 + $0x508] sm:$0xff]
        %v1025 = vld [vmem:[%s768 + $0x510] sm:$0xff]
        %v1026 = vld [vmem:[%s768 + $0x518] sm:$0xff]
        %v1027 = vld [vmem:[%s768 + $0x520] sm:$0xff]
        %v1028 = vld [vmem:[%s768 + $0x528] sm:$0xff]
        %v1029 = vld [vmem:[%s768 + $0x530] sm:$0xff]
        %v1030 = vld [vmem:[%s768 + $0x538] sm:$0xff]
        %v1031 = vld [vmem:[%s768 + $0x540] sm:$0xff]
        %v1032 = vld [vmem:[%s768 + $0x548] sm:$0xff]
        %v1033 = vld [vmem:[%s768 + $0x550] sm:$0xff]
        %v1034 = vld [vmem:[%s768 + $0x558] sm:$0xff]
        %v1035 = vld [vmem:[%s768 + $0x560] sm:$0xff]
        %v1036 = vld [vmem:[%s768 + $0x568] sm:$0xff]
        %v1037 = vld [vmem:[%s768 + $0x570] sm:$0xff]
        %v1038 = vld [vmem:[%s768 + $0x578] sm:$0xff]
        %v1039 = vld [vmem:[%s768 + $0x580] sm:$0xff]
        %v1040 = vld [vmem:[%s768 + $0x588] sm:$0xff]
        %v1041 = vld [vmem:[%s768 + $0x590] sm:$0xff]
        %v1042 = vld [vmem:[%s768 + $0x598] sm:$0xff]
        %v1043 = vld [vmem:[%s768 + $0x5a0] sm:$0xff]
        %v1044 = vld [vmem:[%s768 + $0x5a8] sm:$0xff]
        %v1045 = vld [vmem:[%s768 + $0x5b0] sm:$0xff]
        %v1046 = vld [vmem:[%s768 + $0x5b8] sm:$0xff]
        %v1047 = vld [vmem:[%s768 + $0x5c0] sm:$0xff]
        %v1048 = vld [vmem:[%s768 + $0x5c8] sm:$0xff]
        %v1049 = vld [vmem:[%s768 + $0x5d0] sm:$0xff]
        %v1050 = vld [vmem:[%s768 + $0x5d8] sm:$0xff]
        %v1051 = vld [vmem:[%s768 + $0x5e0] sm:$0xff]
        %v1052 = vld [vmem:[%s768 + $0x5e8] sm:$0xff]
        %v1053 = vld [vmem:[%s768 + $0x5f0] sm:$0xff]
        %v1054 = vld [vmem:[%s768 + $0x5f8] sm:$0xff]
        %v1055 = vld [vmem:[%s768 + $0x600] sm:$0xff]
        %v1056 = vld [vmem:[%s768 + $0x608] sm:$0xff]
        %v1057 = vld [vmem:[%s768 + $0x610] sm:$0xff]
        %v1058 = vld [vmem:[%s768 + $0x618] sm:$0xff]
        %v1059 = vld [vmem:[%s768 + $0x620] sm:$0xff]
        %v1060 = vld [vmem:[%s768 + $0x628] sm:$0xff]
        %v1061 = vld [vmem:[%s768 + $0x630] sm:$0xff]
        %v1062 = vld [vmem:[%s768 + $0x638] sm:$0xff]
        %v1063 = vld [vmem:[%s768 + $0x640] sm:$0xff]
        %v1064 = vld [vmem:[%s768 + $0x648] sm:$0xff]
        %v1065 = vld [vmem:[%s768 + $0x650] sm:$0xff]
        %v1066 = vld [vmem:[%s768 + $0x658] sm:$0xff]
        %v1067 = vld [vmem:[%s768 + $0x660] sm:$0xff]
        %v1068 = vld [vmem:[%s768 + $0x668] sm:$0xff]
        %v1069 = vld [vmem:[%s768 + $0x670] sm:$0xff]
        %v1070 = vld [vmem:[%s768 + $0x678] sm:$0xff]
        %v1071 = vld [vmem:[%s768 + $0x680] sm:$0xff]
        %v1072 = vld [vmem:[%s768 + $0x688] sm:$0xff]
        %v1073 = vld [vmem:[%s768 + $0x690] sm:$0xff]
        %v1074 = vld [vmem:[%s768 + $0x698] sm:$0xff]
        %v1075 = vld [vmem:[%s768 + $0x6a0] sm:$0xff]
        %v1076 = vld [vmem:[%s768 + $0x6a8] sm:$0xff]
        %v1077 = vld [vmem:[%s768 + $0x6b0] sm:$0xff]
        %v1078 = vld [vmem:[%s768 + $0x6b8] sm:$0xff]
        %v1079 = vld [vmem:[%s768 + $0x6c0] sm:$0xff]
        %v1080 = vld [vmem:[%s768 + $0x6c8] sm:$0xff]
        %v1081 = vld [vmem:[%s768 + $0x6d0] sm:$0xff]
        %v1082 = vld [vmem:[%s768 + $0x6d8] sm:$0xff]
        %v1083 = vld [vmem:[%s768 + $0x6e0] sm:$0xff]
        %v1084 = vld [vmem:[%s768 + $0x6e8] sm:$0xff]
        %v1085 = vld [vmem:[%s768 + $0x6f0] sm:$0xff]
        %v1086 = vld [vmem:[%s768 + $0x6f8] sm:$0xff]
        %v1087 = vld [vmem:[%s768 + $0x700] sm:$0xff]
        %v1088 = vld [vmem:[%s768 + $0x708] sm:$0xff]
        %v1089 = vld [vmem:[%s768 + $0x710] sm:$0xff]
        %v1090 = vld [vmem:[%s768 + $0x718] sm:$0xff]
        %v1091 = vld [vmem:[%s768 + $0x720] sm:$0xff]
        %v1092 = vld [vmem:[%s768 + $0x728] sm:$0xff]
        %v1093 = vld [vmem:[%s768 + $0x730] sm:$0xff]
        %v1094 = vld [vmem:[%s768 + $0x738] sm:$0xff]
        %v1095 = vld [vmem:[%s768 + $0x740] sm:$0xff]
        %v1096 = vld [vmem:[%s768 + $0x748] sm:$0xff]
        %v1097 = vld [vmem:[%s768 + $0x750] sm:$0xff]
        %v1098 = vld [vmem:[%s768 + $0x758] sm:$0xff]
        %v1099 = vld [vmem:[%s768 + $0x760] sm:$0xff]
        %v1100 = vld [vmem:[%s768 + $0x768] sm:$0xff]
        %v1101 = vld [vmem:[%s768 + $0x770] sm:$0xff]
        %v1102 = vld [vmem:[%s768 + $0x778] sm:$0xff]
        %v1103 = vld [vmem:[%s768 + $0x780] sm:$0xff]
        %v1104 = vld [vmem:[%s768 + $0x788] sm:$0xff]
        %v1105 = vld [vmem:[%s768 + $0x790] sm:$0xff]
        %v1106 = vld [vmem:[%s768 + $0x798] sm:$0xff]
        %v1107 = vld [vmem:[%s768 + $0x7a0] sm:$0xff]
        %v1108 = vld [vmem:[%s768 + $0x7a8] sm:$0xff]
        %v1109 = vld [vmem:[%s768 + $0x7b0] sm:$0xff]
        %v1110 = vld [vmem:[%s768 + $0x7b8] sm:$0xff]
        %v1111 = vld [vmem:[%s768 + $0x7c0] sm:$0xff]
        %v1112 = vld [vmem:[%s768 + $0x7c8] sm:$0xff]
        %v1113 = vld [vmem:[%s768 + $0x7d0] sm:$0xff]
        %v1114 = vld [vmem:[%s768 + $0x7d8] sm:$0xff]
        %v1115 = vld [vmem:[%s768 + $0x7e0] sm:$0xff]
        %v1116 = vld [vmem:[%s768 + $0x7e8] sm:$0xff]
        %v1117 = vld [vmem:[%s768 + $0x7f0] sm:$0xff]
        %v1118 = vld [vmem:[%s768 + $0x7f8] sm:$0xff]
        %v1119 = vlaneseq
        %v1120 = vand.u32 %v1119, 127
        %v1121 = vadd.s32 %v1120, 128
        %v1122 = vadd.s32 %v1120, 256
        %v1123 = vadd.s32 %v1120, 384
        %s1124 = smul.u32 %s22, 512
        %s1125 = ssub.s32 600, %s1124
        %v1126 = vstv %s1125
        %vm1127 = vcmp.lt.s32.totalorder %v1120, %v1126
        %vm1128 = vcmp.lt.s32.totalorder %v1121, %v1126
        %vm1129 = vcmp.lt.s32.totalorder %v1122, %v1126
        %vm1130 = vcmp.lt.s32.totalorder %v1123, %v1126
        %v1131 = vsel %vm1127, %v863, 0.0
        %v1132 = vsel %vm1128, %v864, 0.0
        %v1133 = vsel %vm1129, %v865, 0.0
        %v1134 = vsel %vm1130, %v866, 0.0
        %v1135 = vsel %vm1127, %v867, 0.0
        %v1136 = vsel %vm1128, %v868, 0.0
        %v1137 = vsel %vm1129, %v869, 0.0
        %v1138 = vsel %vm1130, %v870, 0.0
        %v1139 = vsel %vm1127, %v871, 0.0
        %v1140 = vsel %vm1128, %v872, 0.0
        %v1141 = vsel %vm1129, %v873, 0.0
        %v1142 = vsel %vm1130, %v874, 0.0
        %v1143 = vsel %vm1127, %v875, 0.0
        %v1144 = vsel %vm1128, %v876, 0.0
        %v1145 = vsel %vm1129, %v877, 0.0
        %v1146 = vsel %vm1130, %v878, 0.0
        %v1147 = vsel %vm1127, %v879, 0.0
        %v1148 = vsel %vm1128, %v880, 0.0
        %v1149 = vsel %vm1129, %v881, 0.0
        %v1150 = vsel %vm1130, %v882, 0.0
        %v1151 = vsel %vm1127, %v883, 0.0
        %v1152 = vsel %vm1128, %v884, 0.0
        %v1153 = vsel %vm1129, %v885, 0.0
        %v1154 = vsel %vm1130, %v886, 0.0
        %v1155 = vsel %vm1127, %v887, 0.0
        %v1156 = vsel %vm1128, %v888, 0.0
        %v1157 = vsel %vm1129, %v889, 0.0
        %v1158 = vsel %vm1130, %v890, 0.0
        %v1159 = vsel %vm1127, %v891, 0.0
        %v1160 = vsel %vm1128, %v892, 0.0
        %v1161 = vsel %vm1129, %v893, 0.0
        %v1162 = vsel %vm1130, %v894, 0.0
        %v1163 = vsel %vm1127, %v895, 0.0
        %v1164 = vsel %vm1128, %v896, 0.0
        %v1165 = vsel %vm1129, %v897, 0.0
        %v1166 = vsel %vm1130, %v898, 0.0
        %v1167 = vsel %vm1127, %v899, 0.0
        %v1168 = vsel %vm1128, %v900, 0.0
        %v1169 = vsel %vm1129, %v901, 0.0
        %v1170 = vsel %vm1130, %v902, 0.0
        %v1171 = vsel %vm1127, %v903, 0.0
        %v1172 = vsel %vm1128, %v904, 0.0
        %v1173 = vsel %vm1129, %v905, 0.0
        %v1174 = vsel %vm1130, %v906, 0.0
        %v1175 = vsel %vm1127, %v907, 0.0
        %v1176 = vsel %vm1128, %v908, 0.0
        %v1177 = vsel %vm1129, %v909, 0.0
        %v1178 = vsel %vm1130, %v910, 0.0
        %v1179 = vsel %vm1127, %v911, 0.0
        %v1180 = vsel %vm1128, %v912, 0.0
        %v1181 = vsel %vm1129, %v913, 0.0
        %v1182 = vsel %vm1130, %v914, 0.0
        %v1183 = vsel %vm1127, %v915, 0.0
        %v1184 = vsel %vm1128, %v916, 0.0
        %v1185 = vsel %vm1129, %v917, 0.0
        %v1186 = vsel %vm1130, %v918, 0.0
        %v1187 = vsel %vm1127, %v919, 0.0
        %v1188 = vsel %vm1128, %v920, 0.0
        %v1189 = vsel %vm1129, %v921, 0.0
        %v1190 = vsel %vm1130, %v922, 0.0
        %v1191 = vsel %vm1127, %v923, 0.0
        %v1192 = vsel %vm1128, %v924, 0.0
        %v1193 = vsel %vm1129, %v925, 0.0
        %v1194 = vsel %vm1130, %v926, 0.0
        %v1195 = vsel %vm1127, %v927, 0.0
        %v1196 = vsel %vm1128, %v928, 0.0
        %v1197 = vsel %vm1129, %v929, 0.0
        %v1198 = vsel %vm1130, %v930, 0.0
        %v1199 = vsel %vm1127, %v931, 0.0
        %v1200 = vsel %vm1128, %v932, 0.0
        %v1201 = vsel %vm1129, %v933, 0.0
        %v1202 = vsel %vm1130, %v934, 0.0
        %v1203 = vsel %vm1127, %v935, 0.0
        %v1204 = vsel %vm1128, %v936, 0.0
        %v1205 = vsel %vm1129, %v937, 0.0
        %v1206 = vsel %vm1130, %v938, 0.0
        %v1207 = vsel %vm1127, %v939, 0.0
        %v1208 = vsel %vm1128, %v940, 0.0
        %v1209 = vsel %vm1129, %v941, 0.0
        %v1210 = vsel %vm1130, %v942, 0.0
        %v1211 = vsel %vm1127, %v943, 0.0
        %v1212 = vsel %vm1128, %v944, 0.0
        %v1213 = vsel %vm1129, %v945, 0.0
        %v1214 = vsel %vm1130, %v946, 0.0
        %v1215 = vsel %vm1127, %v947, 0.0
        %v1216 = vsel %vm1128, %v948, 0.0
        %v1217 = vsel %vm1129, %v949, 0.0
        %v1218 = vsel %vm1130, %v950, 0.0
        %v1219 = vsel %vm1127, %v951, 0.0
        %v1220 = vsel %vm1128, %v952, 0.0
        %v1221 = vsel %vm1129, %v953, 0.0
        %v1222 = vsel %vm1130, %v954, 0.0
        %v1223 = vsel %vm1127, %v955, 0.0
        %v1224 = vsel %vm1128, %v956, 0.0
        %v1225 = vsel %vm1129, %v957, 0.0
        %v1226 = vsel %vm1130, %v958, 0.0
        %v1227 = vsel %vm1127, %v959, 0.0
        %v1228 = vsel %vm1128, %v960, 0.0
        %v1229 = vsel %vm1129, %v961, 0.0
        %v1230 = vsel %vm1130, %v962, 0.0
        %v1231 = vsel %vm1127, %v963, 0.0
        %v1232 = vsel %vm1128, %v964, 0.0
        %v1233 = vsel %vm1129, %v965, 0.0
        %v1234 = vsel %vm1130, %v966, 0.0
        %v1235 = vsel %vm1127, %v967, 0.0
        %v1236 = vsel %vm1128, %v968, 0.0
        %v1237 = vsel %vm1129, %v969, 0.0
        %v1238 = vsel %vm1130, %v970, 0.0
        %v1239 = vsel %vm1127, %v971, 0.0
        %v1240 = vsel %vm1128, %v972, 0.0
        %v1241 = vsel %vm1129, %v973, 0.0
        %v1242 = vsel %vm1130, %v974, 0.0
        %v1243 = vsel %vm1127, %v975, 0.0
        %v1244 = vsel %vm1128, %v976, 0.0
        %v1245 = vsel %vm1129, %v977, 0.0
        %v1246 = vsel %vm1130, %v978, 0.0
        %v1247 = vsel %vm1127, %v979, 0.0
        %v1248 = vsel %vm1128, %v980, 0.0
        %v1249 = vsel %vm1129, %v981, 0.0
        %v1250 = vsel %vm1130, %v982, 0.0
        %v1251 = vsel %vm1127, %v983, 0.0
        %v1252 = vsel %vm1128, %v984, 0.0
        %v1253 = vsel %vm1129, %v985, 0.0
        %v1254 = vsel %vm1130, %v986, 0.0
        %v1255 = vsel %vm1127, %v987, 0.0
        %v1256 = vsel %vm1128, %v988, 0.0
        %v1257 = vsel %vm1129, %v989, 0.0
        %v1258 = vsel %vm1130, %v990, 0.0
        %v1259 = vsel %vm1127, %v991, 0.0
        %v1260 = vsel %vm1128, %v992, 0.0
        %v1261 = vsel %vm1129, %v993, 0.0
        %v1262 = vsel %vm1130, %v994, 0.0
        %v1263 = vsel %vm1127, %v995, 0.0
        %v1264 = vsel %vm1128, %v996, 0.0
        %v1265 = vsel %vm1129, %v997, 0.0
        %v1266 = vsel %vm1130, %v998, 0.0
        %v1267 = vsel %vm1127, %v999, 0.0
        %v1268 = vsel %vm1128, %v1000, 0.0
        %v1269 = vsel %vm1129, %v1001, 0.0
        %v1270 = vsel %vm1130, %v1002, 0.0
        %v1271 = vsel %vm1127, %v1003, 0.0
        %v1272 = vsel %vm1128, %v1004, 0.0
        %v1273 = vsel %vm1129, %v1005, 0.0
        %v1274 = vsel %vm1130, %v1006, 0.0
        %v1275 = vsel %vm1127, %v1007, 0.0
        %v1276 = vsel %vm1128, %v1008, 0.0
        %v1277 = vsel %vm1129, %v1009, 0.0
        %v1278 = vsel %vm1130, %v1010, 0.0
        %v1279 = vsel %vm1127, %v1011, 0.0
        %v1280 = vsel %vm1128, %v1012, 0.0
        %v1281 = vsel %vm1129, %v1013, 0.0
        %v1282 = vsel %vm1130, %v1014, 0.0
        %v1283 = vsel %vm1127, %v1015, 0.0
        %v1284 = vsel %vm1128, %v1016, 0.0
        %v1285 = vsel %vm1129, %v1017, 0.0
        %v1286 = vsel %vm1130, %v1018, 0.0
        %v1287 = vsel %vm1127, %v1019, 0.0
        %v1288 = vsel %vm1128, %v1020, 0.0
        %v1289 = vsel %vm1129, %v1021, 0.0
        %v1290 = vsel %vm1130, %v1022, 0.0
        %v1291 = vsel %vm1127, %v1023, 0.0
        %v1292 = vsel %vm1128, %v1024, 0.0
        %v1293 = vsel %vm1129, %v1025, 0.0
        %v1294 = vsel %vm1130, %v1026, 0.0
        %v1295 = vsel %vm1127, %v1027, 0.0
        %v1296 = vsel %vm1128, %v1028, 0.0
        %v1297 = vsel %vm1129, %v1029, 0.0
        %v1298 = vsel %vm1130, %v1030, 0.0
        %v1299 = vsel %vm1127, %v1031, 0.0
        %v1300 = vsel %vm1128, %v1032, 0.0
        %v1301 = vsel %vm1129, %v1033, 0.0
        %v1302 = vsel %vm1130, %v1034, 0.0
        %v1303 = vsel %vm1127, %v1035, 0.0
        %v1304 = vsel %vm1128, %v1036, 0.0
        %v1305 = vsel %vm1129, %v1037, 0.0
        %v1306 = vsel %vm1130, %v1038, 0.0
        %v1307 = vsel %vm1127, %v1039, 0.0
        %v1308 = vsel %vm1128, %v1040, 0.0
        %v1309 = vsel %vm1129, %v1041, 0.0
        %v1310 = vsel %vm1130, %v1042, 0.0
        %v1311 = vsel %vm1127, %v1043, 0.0
        %v1312 = vsel %vm1128, %v1044, 0.0
        %v1313 = vsel %vm1129, %v1045, 0.0
        %v1314 = vsel %vm1130, %v1046, 0.0
        %v1315 = vsel %vm1127, %v1047, 0.0
        %v1316 = vsel %vm1128, %v1048, 0.0
        %v1317 = vsel %vm1129, %v1049, 0.0
        %v1318 = vsel %vm1130, %v1050, 0.0
        %v1319 = vsel %vm1127, %v1051, 0.0
        %v1320 = vsel %vm1128, %v1052, 0.0
        %v1321 = vsel %vm1129, %v1053, 0.0
        %v1322 = vsel %vm1130, %v1054, 0.0
        %v1323 = vsel %vm1127, %v1055, 0.0
        %v1324 = vsel %vm1128, %v1056, 0.0
        %v1325 = vsel %vm1129, %v1057, 0.0
        %v1326 = vsel %vm1130, %v1058, 0.0
        %v1327 = vsel %vm1127, %v1059, 0.0
        %v1328 = vsel %vm1128, %v1060, 0.0
        %v1329 = vsel %vm1129, %v1061, 0.0
        %v1330 = vsel %vm1130, %v1062, 0.0
        %v1331 = vsel %vm1127, %v1063, 0.0
        %v1332 = vsel %vm1128, %v1064, 0.0
        %v1333 = vsel %vm1129, %v1065, 0.0
        %v1334 = vsel %vm1130, %v1066, 0.0
        %v1335 = vsel %vm1127, %v1067, 0.0
        %v1336 = vsel %vm1128, %v1068, 0.0
        %v1337 = vsel %vm1129, %v1069, 0.0
        %v1338 = vsel %vm1130, %v1070, 0.0
        %v1339 = vsel %vm1127, %v1071, 0.0
        %v1340 = vsel %vm1128, %v1072, 0.0
        %v1341 = vsel %vm1129, %v1073, 0.0
        %v1342 = vsel %vm1130, %v1074, 0.0
        %v1343 = vsel %vm1127, %v1075, 0.0
        %v1344 = vsel %vm1128, %v1076, 0.0
        %v1345 = vsel %vm1129, %v1077, 0.0
        %v1346 = vsel %vm1130, %v1078, 0.0
        %v1347 = vsel %vm1127, %v1079, 0.0
        %v1348 = vsel %vm1128, %v1080, 0.0
        %v1349 = vsel %vm1129, %v1081, 0.0
        %v1350 = vsel %vm1130, %v1082, 0.0
        %v1351 = vsel %vm1127, %v1083, 0.0
        %v1352 = vsel %vm1128, %v1084, 0.0
        %v1353 = vsel %vm1129, %v1085, 0.0
        %v1354 = vsel %vm1130, %v1086, 0.0
        %v1355 = vsel %vm1127, %v1087, 0.0
        %v1356 = vsel %vm1128, %v1088, 0.0
        %v1357 = vsel %vm1129, %v1089, 0.0
        %v1358 = vsel %vm1130, %v1090, 0.0
        %v1359 = vsel %vm1127, %v1091, 0.0
        %v1360 = vsel %vm1128, %v1092, 0.0
        %v1361 = vsel %vm1129, %v1093, 0.0
        %v1362 = vsel %vm1130, %v1094, 0.0
        %v1363 = vsel %vm1127, %v1095, 0.0
        %v1364 = vsel %vm1128, %v1096, 0.0
        %v1365 = vsel %vm1129, %v1097, 0.0
        %v1366 = vsel %vm1130, %v1098, 0.0
        %v1367 = vsel %vm1127, %v1099, 0.0
        %v1368 = vsel %vm1128, %v1100, 0.0
        %v1369 = vsel %vm1129, %v1101, 0.0
        %v1370 = vsel %vm1130, %v1102, 0.0
        %v1371 = vsel %vm1127, %v1103, 0.0
        %v1372 = vsel %vm1128, %v1104, 0.0
        %v1373 = vsel %vm1129, %v1105, 0.0
        %v1374 = vsel %vm1130, %v1106, 0.0
        %v1375 = vsel %vm1127, %v1107, 0.0
        %v1376 = vsel %vm1128, %v1108, 0.0
        %v1377 = vsel %vm1129, %v1109, 0.0
        %v1378 = vsel %vm1130, %v1110, 0.0
        %v1379 = vsel %vm1127, %v1111, 0.0
        %v1380 = vsel %vm1128, %v1112, 0.0
        %v1381 = vsel %vm1129, %v1113, 0.0
        %v1382 = vsel %vm1130, %v1114, 0.0
        %v1383 = vsel %vm1127, %v1115, 0.0
        %v1384 = vsel %vm1128, %v1116, 0.0
        %v1385 = vsel %vm1129, %v1117, 0.0
        %v1386 = vsel %vm1130, %v1118, 0.0
        %v1387 = vadd.f32 %v1131, %v1132
        %v1388 = vadd.f32 %v1135, %v1136
        %v1389 = vadd.f32 %v1139, %v1140
        %v1390 = vadd.f32 %v1143, %v1144
        %v1391 = vadd.f32 %v1147, %v1148
        %v1392 = vadd.f32 %v1151, %v1152
        %v1393 = vadd.f32 %v1155, %v1156
        %v1394 = vadd.f32 %v1159, %v1160
        %v1395 = vadd.f32 %v1163, %v1164
        %v1396 = vadd.f32 %v1167, %v1168
        %v1397 = vadd.f32 %v1171, %v1172
        %v1398 = vadd.f32 %v1175, %v1176
        %v1399 = vadd.f32 %v1179, %v1180
        %v1400 = vadd.f32 %v1183, %v1184
        %v1401 = vadd.f32 %v1187, %v1188
        %v1402 = vadd.f32 %v1191, %v1192
        %v1403 = vadd.f32 %v1195, %v1196
        %v1404 = vadd.f32 %v1199, %v1200
        %v1405 = vadd.f32 %v1203, %v1204
        %v1406 = vadd.f32 %v1207, %v1208
        %v1407 = vadd.f32 %v1211, %v1212
        %v1408 = vadd.f32 %v1215, %v1216
        %v1409 = vadd.f32 %v1219, %v1220
        %v1410 = vadd.f32 %v1223, %v1224
        %v1411 = vadd.f32 %v1227, %v1228
        %v1412 = vadd.f32 %v1231, %v1232
        %v1413 = vadd.f32 %v1235, %v1236
        %v1414 = vadd.f32 %v1239, %v1240
        %v1415 = vadd.f32 %v1243, %v1244
        %v1416 = vadd.f32 %v1247, %v1248
        %v1417 = vadd.f32 %v1251, %v1252
        %v1418 = vadd.f32 %v1255, %v1256
        %v1419 = vadd.f32 %v1259, %v1260
        %v1420 = vadd.f32 %v1263, %v1264
        %v1421 = vadd.f32 %v1267, %v1268
        %v1422 = vadd.f32 %v1271, %v1272
        %v1423 = vadd.f32 %v1275, %v1276
        %v1424 = vadd.f32 %v1279, %v1280
        %v1425 = vadd.f32 %v1283, %v1284
        %v1426 = vadd.f32 %v1287, %v1288
        %v1427 = vadd.f32 %v1291, %v1292
        %v1428 = vadd.f32 %v1295, %v1296
        %v1429 = vadd.f32 %v1299, %v1300
        %v1430 = vadd.f32 %v1303, %v1304
        %v1431 = vadd.f32 %v1307, %v1308
        %v1432 = vadd.f32 %v1311, %v1312
        %v1433 = vadd.f32 %v1315, %v1316
        %v1434 = vadd.f32 %v1319, %v1320
        %v1435 = vadd.f32 %v1323, %v1324
        %v1436 = vadd.f32 %v1327, %v1328
        %v1437 = vadd.f32 %v1331, %v1332
        %v1438 = vadd.f32 %v1335, %v1336
        %v1439 = vadd.f32 %v1339, %v1340
        %v1440 = vadd.f32 %v1343, %v1344
        %v1441 = vadd.f32 %v1347, %v1348
        %v1442 = vadd.f32 %v1351, %v1352
        %v1443 = vadd.f32 %v1355, %v1356
        %v1444 = vadd.f32 %v1359, %v1360
        %v1445 = vadd.f32 %v1363, %v1364
        %v1446 = vadd.f32 %v1367, %v1368
        %v1447 = vadd.f32 %v1371, %v1372
        %v1448 = vadd.f32 %v1375, %v1376
        %v1449 = vadd.f32 %v1379, %v1380
        %v1450 = vadd.f32 %v1383, %v1384
        %v1451 = vadd.f32 %v1387, %v1133
        %v1452 = vadd.f32 %v1388, %v1137
        %v1453 = vadd.f32 %v1389, %v1141
        %v1454 = vadd.f32 %v1390, %v1145
        %v1455 = vadd.f32 %v1391, %v1149
        %v1456 = vadd.f32 %v1392, %v1153
        %v1457 = vadd.f32 %v1393, %v1157
        %v1458 = vadd.f32 %v1394, %v1161
        %v1459 = vadd.f32 %v1395, %v1165
        %v1460 = vadd.f32 %v1396, %v1169
        %v1461 = vadd.f32 %v1397, %v1173
        %v1462 = vadd.f32 %v1398, %v1177
        %v1463 = vadd.f32 %v1399, %v1181
        %v1464 = vadd.f32 %v1400, %v1185
        %v1465 = vadd.f32 %v1401, %v1189
        %v1466 = vadd.f32 %v1402, %v1193
        %v1467 = vadd.f32 %v1403, %v1197
        %v1468 = vadd.f32 %v1404, %v1201
        %v1469 = vadd.f32 %v1405, %v1205
        %v1470 = vadd.f32 %v1406, %v1209
        %v1471 = vadd.f32 %v1407, %v1213
        %v1472 = vadd.f32 %v1408, %v1217
        %v1473 = vadd.f32 %v1409, %v1221
        %v1474 = vadd.f32 %v1410, %v1225
        %v1475 = vadd.f32 %v1411, %v1229
        %v1476 = vadd.f32 %v1412, %v1233
        %v1477 = vadd.f32 %v1413, %v1237
        %v1478 = vadd.f32 %v1414, %v1241
        %v1479 = vadd.f32 %v1415, %v1245
        %v1480 = vadd.f32 %v1416, %v1249
        %v1481 = vadd.f32 %v1417, %v1253
        %v1482 = vadd.f32 %v1418, %v1257
        %v1483 = vadd.f32 %v1419, %v1261
        %v1484 = vadd.f32 %v1420, %v1265
        %v1485 = vadd.f32 %v1421, %v1269
        %v1486 = vadd.f32 %v1422, %v1273
        %v1487 = vadd.f32 %v1423, %v1277
        %v1488 = vadd.f32 %v1424, %v1281
        %v1489 = vadd.f32 %v1425, %v1285
        %v1490 = vadd.f32 %v1426, %v1289
        %v1491 = vadd.f32 %v1427, %v1293
        %v1492 = vadd.f32 %v1428, %v1297
        %v1493 = vadd.f32 %v1429, %v1301
        %v1494 = vadd.f32 %v1430, %v1305
        %v1495 = vadd.f32 %v1431, %v1309
        %v1496 = vadd.f32 %v1432, %v1313
        %v1497 = vadd.f32 %v1433, %v1317
        %v1498 = vadd.f32 %v1434, %v1321
        %v1499 = vadd.f32 %v1435, %v1325
        %v1500 = vadd.f32 %v1436, %v1329
        %v1501 = vadd.f32 %v1437, %v1333
        %v1502 = vadd.f32 %v1438, %v1337
        %v1503 = vadd.f32 %v1439, %v1341
        %v1504 = vadd.f32 %v1440, %v1345
        %v1505 = vadd.f32 %v1441, %v1349
        %v1506 = vadd.f32 %v1442, %v1353
        %v1507 = vadd.f32 %v1443, %v1357
        %v1508 = vadd.f32 %v1444, %v1361
        %v1509 = vadd.f32 %v1445, %v1365
        %v1510 = vadd.f32 %v1446, %v1369
        %v1511 = vadd.f32 %v1447, %v1373
        %v1512 = vadd.f32 %v1448, %v1377
        %v1513 = vadd.f32 %v1449, %v1381
        %v1514 = vadd.f32 %v1450, %v1385
        %v1515 = vadd.f32 %v1451, %v1134
        %v1516 = vadd.f32 %v1452, %v1138
        %v1517 = vadd.f32 %v1453, %v1142
        %v1518 = vadd.f32 %v1454, %v1146
        %v1519 = vadd.f32 %v1455, %v1150
        %v1520 = vadd.f32 %v1456, %v1154
        %v1521 = vadd.f32 %v1457, %v1158
        %v1522 = vadd.f32 %v1458, %v1162
        %v1523 = vadd.f32 %v1459, %v1166
        %v1524 = vadd.f32 %v1460, %v1170
        %v1525 = vadd.f32 %v1461, %v1174
        %v1526 = vadd.f32 %v1462, %v1178
        %v1527 = vadd.f32 %v1463, %v1182
        %v1528 = vadd.f32 %v1464, %v1186
        %v1529 = vadd.f32 %v1465, %v1190
        %v1530 = vadd.f32 %v1466, %v1194
        %v1531 = vadd.f32 %v1467, %v1198
        %v1532 = vadd.f32 %v1468, %v1202
        %v1533 = vadd.f32 %v1469, %v1206
        %v1534 = vadd.f32 %v1470, %v1210
        %v1535 = vadd.f32 %v1471, %v1214
        %v1536 = vadd.f32 %v1472, %v1218
        %v1537 = vadd.f32 %v1473, %v1222
        %v1538 = vadd.f32 %v1474, %v1226
        %v1539 = vadd.f32 %v1475, %v1230
        %v1540 = vadd.f32 %v1476, %v1234
        %v1541 = vadd.f32 %v1477, %v1238
        %v1542 = vadd.f32 %v1478, %v1242
        %v1543 = vadd.f32 %v1479, %v1246
        %v1544 = vadd.f32 %v1480, %v1250
        %v1545 = vadd.f32 %v1481, %v1254
        %v1546 = vadd.f32 %v1482, %v1258
        %v1547 = vadd.f32 %v1483, %v1262
        %v1548 = vadd.f32 %v1484, %v1266
        %v1549 = vadd.f32 %v1485, %v1270
        %v1550 = vadd.f32 %v1486, %v1274
        %v1551 = vadd.f32 %v1487, %v1278
        %v1552 = vadd.f32 %v1488, %v1282
        %v1553 = vadd.f32 %v1489, %v1286
        %v1554 = vadd.f32 %v1490, %v1290
        %v1555 = vadd.f32 %v1491, %v1294
        %v1556 = vadd.f32 %v1492, %v1298
        %v1557 = vadd.f32 %v1493, %v1302
        %v1558 = vadd.f32 %v1494, %v1306
        %v1559 = vadd.f32 %v1495, %v1310
        %v1560 = vadd.f32 %v1496, %v1314
        %v1561 = vadd.f32 %v1497, %v1318
        %v1562 = vadd.f32 %v1498, %v1322
        %v1563 = vadd.f32 %v1499, %v1326
        %v1564 = vadd.f32 %v1500, %v1330
        %v1565 = vadd.f32 %v1501, %v1334
        %v1566 = vadd.f32 %v1502, %v1338
        %v1567 = vadd.f32 %v1503, %v1342
        %v1568 = vadd.f32 %v1504, %v1346
        %v1569 = vadd.f32 %v1505, %v1350
        %v1570 = vadd.f32 %v1506, %v1354
        %v1571 = vadd.f32 %v1507, %v1358
        %v1572 = vadd.f32 %v1508, %v1362
        %v1573 = vadd.f32 %v1509, %v1366
        %v1574 = vadd.f32 %v1510, %v1370
        %v1575 = vadd.f32 %v1511, %v1374
        %v1576 = vadd.f32 %v1512, %v1378
        %v1577 = vadd.f32 %v1513, %v1382
        %v1578 = vadd.f32 %v1514, %v1386
        %v1579 = vld [vmem:[#allocation2] sm:$0xff]
        %v1580 = vld [vmem:[#allocation2 + $0x8] sm:$0xff]
        %v1581 = vld [vmem:[#allocation2 + $0x10] sm:$0xff]
        %v1582 = vld [vmem:[#allocation2 + $0x18] sm:$0xff]
        %v1583 = vld [vmem:[#allocation2 + $0x20] sm:$0xff]
        %v1584 = vld [vmem:[#allocation2 + $0x28] sm:$0xff]
        %v1585 = vld [vmem:[#allocation2 + $0x30] sm:$0xff]
        %v1586 = vld [vmem:[#allocation2 + $0x38] sm:$0xff]
        %v1587 = vld [vmem:[#allocation2 + $0x40] sm:$0xff]
        %v1588 = vld [vmem:[#allocation2 + $0x48] sm:$0xff]
        %v1589 = vld [vmem:[#allocation2 + $0x50] sm:$0xff]
        %v1590 = vld [vmem:[#allocation2 + $0x58] sm:$0xff]
        %v1591 = vld [vmem:[#allocation2 + $0x60] sm:$0xff]
        %v1592 = vld [vmem:[#allocation2 + $0x68] sm:$0xff]
        %v1593 = vld [vmem:[#allocation2 + $0x70] sm:$0xff]
        %v1594 = vld [vmem:[#allocation2 + $0x78] sm:$0xff]
        %v1595 = vld [vmem:[#allocation2 + $0x80] sm:$0xff]
        %v1596 = vld [vmem:[#allocation2 + $0x88] sm:$0xff]
        %v1597 = vld [vmem:[#allocation2 + $0x90] sm:$0xff]
        %v1598 = vld [vmem:[#allocation2 + $0x98] sm:$0xff]
        %v1599 = vld [vmem:[#allocation2 + $0xa0] sm:$0xff]
        %v1600 = vld [vmem:[#allocation2 + $0xa8] sm:$0xff]
        %v1601 = vld [vmem:[#allocation2 + $0xb0] sm:$0xff]
        %v1602 = vld [vmem:[#allocation2 + $0xb8] sm:$0xff]
        %v1603 = vld [vmem:[#allocation2 + $0xc0] sm:$0xff]
        %v1604 = vld [vmem:[#allocation2 + $0xc8] sm:$0xff]
        %v1605 = vld [vmem:[#allocation2 + $0xd0] sm:$0xff]
        %v1606 = vld [vmem:[#allocation2 + $0xd8] sm:$0xff]
        %v1607 = vld [vmem:[#allocation2 + $0xe0] sm:$0xff]
        %v1608 = vld [vmem:[#allocation2 + $0xe8] sm:$0xff]
        %v1609 = vld [vmem:[#allocation2 + $0xf0] sm:$0xff]
        %v1610 = vld [vmem:[#allocation2 + $0xf8] sm:$0xff]
        %v1611 = vld [vmem:[#allocation2 + $0x100] sm:$0xff]
        %v1612 = vld [vmem:[#allocation2 + $0x108] sm:$0xff]
        %v1613 = vld [vmem:[#allocation2 + $0x110] sm:$0xff]
        %v1614 = vld [vmem:[#allocation2 + $0x118] sm:$0xff]
        %v1615 = vld [vmem:[#allocation2 + $0x120] sm:$0xff]
        %v1616 = vld [vmem:[#allocation2 + $0x128] sm:$0xff]
        %v1617 = vld [vmem:[#allocation2 + $0x130] sm:$0xff]
        %v1618 = vld [vmem:[#allocation2 + $0x138] sm:$0xff]
        %v1619 = vld [vmem:[#allocation2 + $0x140] sm:$0xff]
        %v1620 = vld [vmem:[#allocation2 + $0x148] sm:$0xff]
        %v1621 = vld [vmem:[#allocation2 + $0x150] sm:$0xff]
        %v1622 = vld [vmem:[#allocation2 + $0x158] sm:$0xff]
        %v1623 = vld [vmem:[#allocation2 + $0x160] sm:$0xff]
        %v1624 = vld [vmem:[#allocation2 + $0x168] sm:$0xff]
        %v1625 = vld [vmem:[#allocation2 + $0x170] sm:$0xff]
        %v1626 = vld [vmem:[#allocation2 + $0x178] sm:$0xff]
        %v1627 = vld [vmem:[#allocation2 + $0x180] sm:$0xff]
        %v1628 = vld [vmem:[#allocation2 + $0x188] sm:$0xff]
        %v1629 = vld [vmem:[#allocation2 + $0x190] sm:$0xff]
        %v1630 = vld [vmem:[#allocation2 + $0x198] sm:$0xff]
        %v1631 = vld [vmem:[#allocation2 + $0x1a0] sm:$0xff]
        %v1632 = vld [vmem:[#allocation2 + $0x1a8] sm:$0xff]
        %v1633 = vld [vmem:[#allocation2 + $0x1b0] sm:$0xff]
        %v1634 = vld [vmem:[#allocation2 + $0x1b8] sm:$0xff]
        %v1635 = vld [vmem:[#allocation2 + $0x1c0] sm:$0xff]
        %v1636 = vld [vmem:[#allocation2 + $0x1c8] sm:$0xff]
        %v1637 = vld [vmem:[#allocation2 + $0x1d0] sm:$0xff]
        %v1638 = vld [vmem:[#allocation2 + $0x1d8] sm:$0xff]
        %v1639 = vld [vmem:[#allocation2 + $0x1e0] sm:$0xff]
        %v1640 = vld [vmem:[#allocation2 + $0x1e8] sm:$0xff]
        %v1641 = vld [vmem:[#allocation2 + $0x1f0] sm:$0xff]
        %v1642 = vld [vmem:[#allocation2 + $0x1f8] sm:$0xff]
        %v1643 = vadd.f32 %v1579, %v1515
        %v1644 = vadd.f32 %v1580, %v1516
        %v1645 = vadd.f32 %v1581, %v1517
        %v1646 = vadd.f32 %v1582, %v1518
        %v1647 = vadd.f32 %v1583, %v1519
        %v1648 = vadd.f32 %v1584, %v1520
        %v1649 = vadd.f32 %v1585, %v1521
        %v1650 = vadd.f32 %v1586, %v1522
        %v1651 = vadd.f32 %v1587, %v1523
        %v1652 = vadd.f32 %v1588, %v1524
        %v1653 = vadd.f32 %v1589, %v1525
        %v1654 = vadd.f32 %v1590, %v1526
        %v1655 = vadd.f32 %v1591, %v1527
        %v1656 = vadd.f32 %v1592, %v1528
        %v1657 = vadd.f32 %v1593, %v1529
        %v1658 = vadd.f32 %v1594, %v1530
        %v1659 = vadd.f32 %v1595, %v1531
        %v1660 = vadd.f32 %v1596, %v1532
        %v1661 = vadd.f32 %v1597, %v1533
        %v1662 = vadd.f32 %v1598, %v1534
        %v1663 = vadd.f32 %v1599, %v1535
        %v1664 = vadd.f32 %v1600, %v1536
        %v1665 = vadd.f32 %v1601, %v1537
        %v1666 = vadd.f32 %v1602, %v1538
        %v1667 = vadd.f32 %v1603, %v1539
        %v1668 = vadd.f32 %v1604, %v1540
        %v1669 = vadd.f32 %v1605, %v1541
        %v1670 = vadd.f32 %v1606, %v1542
        %v1671 = vadd.f32 %v1607, %v1543
        %v1672 = vadd.f32 %v1608, %v1544
        %v1673 = vadd.f32 %v1609, %v1545
        %v1674 = vadd.f32 %v1610, %v1546
        %v1675 = vadd.f32 %v1611, %v1547
        %v1676 = vadd.f32 %v1612, %v1548
        %v1677 = vadd.f32 %v1613, %v1549
        %v1678 = vadd.f32 %v1614, %v1550
        %v1679 = vadd.f32 %v1615, %v1551
        %v1680 = vadd.f32 %v1616, %v1552
        %v1681 = vadd.f32 %v1617, %v1553
        %v1682 = vadd.f32 %v1618, %v1554
        %v1683 = vadd.f32 %v1619, %v1555
        %v1684 = vadd.f32 %v1620, %v1556
        %v1685 = vadd.f32 %v1621, %v1557
        %v1686 = vadd.f32 %v1622, %v1558
        %v1687 = vadd.f32 %v1623, %v1559
        %v1688 = vadd.f32 %v1624, %v1560
        %v1689 = vadd.f32 %v1625, %v1561
        %v1690 = vadd.f32 %v1626, %v1562
        %v1691 = vadd.f32 %v1627, %v1563
        %v1692 = vadd.f32 %v1628, %v1564
        %v1693 = vadd.f32 %v1629, %v1565
        %v1694 = vadd.f32 %v1630, %v1566
        %v1695 = vadd.f32 %v1631, %v1567
        %v1696 = vadd.f32 %v1632, %v1568
        %v1697 = vadd.f32 %v1633, %v1569
        %v1698 = vadd.f32 %v1634, %v1570
        %v1699 = vadd.f32 %v1635, %v1571
        %v1700 = vadd.f32 %v1636, %v1572
        %v1701 = vadd.f32 %v1637, %v1573
        %v1702 = vadd.f32 %v1638, %v1574
        %v1703 = vadd.f32 %v1639, %v1575
        %v1704 = vadd.f32 %v1640, %v1576
        %v1705 = vadd.f32 %v1641, %v1577
        %v1706 = vadd.f32 %v1642, %v1578
        %1707 = vst [vmem:[#allocation2] sm:$0xff] %v1643
        %1708 = vst [vmem:[#allocation2 + $0x8] sm:$0xff] %v1644
        %1709 = vst [vmem:[#allocation2 + $0x10] sm:$0xff] %v1645
        %1710 = vst [vmem:[#allocation2 + $0x18] sm:$0xff] %v1646
        %1711 = vst [vmem:[#allocation2 + $0x20] sm:$0xff] %v1647
        %1712 = vst [vmem:[#allocation2 + $0x28] sm:$0xff] %v1648
        %1713 = vst [vmem:[#allocation2 + $0x30] sm:$0xff] %v1649
        %1714 = vst [vmem:[#allocation2 + $0x38] sm:$0xff] %v1650
        %1715 = vst [vmem:[#allocation2 + $0x40] sm:$0xff] %v1651
        %1716 = vst [vmem:[#allocation2 + $0x48] sm:$0xff] %v1652
        %1717 = vst [vmem:[#allocation2 + $0x50] sm:$0xff] %v1653
        %1718 = vst [vmem:[#allocation2 + $0x58] sm:$0xff] %v1654
        %1719 = vst [vmem:[#allocation2 + $0x60] sm:$0xff] %v1655
        %1720 = vst [vmem:[#allocation2 + $0x68] sm:$0xff] %v1656
        %1721 = vst [vmem:[#allocation2 + $0x70] sm:$0xff] %v1657
        %1722 = vst [vmem:[#allocation2 + $0x78] sm:$0xff] %v1658
        %1723 = vst [vmem:[#allocation2 + $0x80] sm:$0xff] %v1659
        %1724 = vst [vmem:[#allocation2 + $0x88] sm:$0xff] %v1660
        %1725 = vst [vmem:[#allocation2 + $0x90] sm:$0xff] %v1661
        %1726 = vst [vmem:[#allocation2 + $0x98] sm:$0xff] %v1662
        %1727 = vst [vmem:[#allocation2 + $0xa0] sm:$0xff] %v1663
        %1728 = vst [vmem:[#allocation2 + $0xa8] sm:$0xff] %v1664
        %1729 = vst [vmem:[#allocation2 + $0xb0] sm:$0xff] %v1665
        %1730 = vst [vmem:[#allocation2 + $0xb8] sm:$0xff] %v1666
        %1731 = vst [vmem:[#allocation2 + $0xc0] sm:$0xff] %v1667
        %1732 = vst [vmem:[#allocation2 + $0xc8] sm:$0xff] %v1668
        %1733 = vst [vmem:[#allocation2 + $0xd0] sm:$0xff] %v1669
        %1734 = vst [vmem:[#allocation2 + $0xd8] sm:$0xff] %v1670
        %1735 = vst [vmem:[#allocation2 + $0xe0] sm:$0xff] %v1671
        %1736 = vst [vmem:[#allocation2 + $0xe8] sm:$0xff] %v1672
        %1737 = vst [vmem:[#allocation2 + $0xf0] sm:$0xff] %v1673
        %1738 = vst [vmem:[#allocation2 + $0xf8] sm:$0xff] %v1674
        %1739 = vst [vmem:[#allocation2 + $0x100] sm:$0xff] %v1675
        %1740 = vst [vmem:[#allocation2 + $0x108] sm:$0xff] %v1676
        %1741 = vst [vmem:[#allocation2 + $0x110] sm:$0xff] %v1677
        %1742 = vst [vmem:[#allocation2 + $0x118] sm:$0xff] %v1678
        %1743 = vst [vmem:[#allocation2 + $0x120] sm:$0xff] %v1679
        %1744 = vst [vmem:[#allocation2 + $0x128] sm:$0xff] %v1680
        %1745 = vst [vmem:[#allocation2 + $0x130] sm:$0xff] %v1681
        %1746 = vst [vmem:[#allocation2 + $0x138] sm:$0xff] %v1682
        %1747 = vst [vmem:[#allocation2 + $0x140] sm:$0xff] %v1683
        %1748 = vst [vmem:[#allocation2 + $0x148] sm:$0xff] %v1684
        %1749 = vst [vmem:[#allocation2 + $0x150] sm:$0xff] %v1685
        %1750 = vst [vmem:[#allocation2 + $0x158] sm:$0xff] %v1686
        %1751 = vst [vmem:[#allocation2 + $0x160] sm:$0xff] %v1687
        %1752 = vst [vmem:[#allocation2 + $0x168] sm:$0xff] %v1688
        %1753 = vst [vmem:[#allocation2 + $0x170] sm:$0xff] %v1689
        %1754 = vst [vmem:[#allocation2 + $0x178] sm:$0xff] %v1690
        %1755 = vst [vmem:[#allocation2 + $0x180] sm:$0xff] %v1691
        %1756 = vst [vmem:[#allocation2 + $0x188] sm:$0xff] %v1692
        %1757 = vst [vmem:[#allocation2 + $0x190] sm:$0xff] %v1693
        %1758 = vst [vmem:[#allocation2 + $0x198] sm:$0xff] %v1694
        %1759 = vst [vmem:[#allocation2 + $0x1a0] sm:$0xff] %v1695
        %1760 = vst [vmem:[#allocation2 + $0x1a8] sm:$0xff] %v1696
        %1761 = vst [vmem:[#allocation2 + $0x1b0] sm:$0xff] %v1697
        %1762 = vst [vmem:[#allocation2 + $0x1b8] sm:$0xff] %v1698
        %1763 = vst [vmem:[#allocation2 + $0x1c0] sm:$0xff] %v1699
        %1764 = vst [vmem:[#allocation2 + $0x1c8] sm:$0xff] %v1700
        %1765 = vst [vmem:[#allocation2 + $0x1d0] sm:$0xff] %v1701
        %1766 = vst [vmem:[#allocation2 + $0x1d8] sm:$0xff] %v1702
        %1767 = vst [vmem:[#allocation2 + $0x1e0] sm:$0xff] %v1703
        %1768 = vst [vmem:[#allocation2 + $0x1e8] sm:$0xff] %v1704
        %1769 = vst [vmem:[#allocation2 + $0x1f0] sm:$0xff] %v1705
        %1770 = vst [vmem:[#allocation2 + $0x1f8] sm:$0xff] %v1706
        %p1771 = scmp.eq.s32.totalorder %s22, 1
        // Predicated region
        $region89: #{_proj_head_single.1} parent=79 // pred_check
          %p1772 = pneg %p1771
        $region90: #{_proj_head_single.1} parent=79 // pred_check_branch
          %1774 = sbr.rel (%p1772) target = $region92
        $region91: #{_proj_head_single.1} parent=79 // pred_region
          %v1775 = vld [vmem:[#allocation2] sm:$0xff]
          %v1776 = vld [vmem:[#allocation2 + $0x8] sm:$0xff]
          %v1777 = vld [vmem:[#allocation2 + $0x10] sm:$0xff]
          %v1778 = vld [vmem:[#allocation2 + $0x18] sm:$0xff]
          %v1779 = vld [vmem:[#allocation2 + $0x20] sm:$0xff]
          %v1780 = vld [vmem:[#allocation2 + $0x28] sm:$0xff]
          %v1781 = vld [vmem:[#allocation2 + $0x30] sm:$0xff]
          %v1782 = vld [vmem:[#allocation2 + $0x38] sm:$0xff]
          %v1783 = vld [vmem:[#allocation2 + $0x40] sm:$0xff]
          %v1784 = vld [vmem:[#allocation2 + $0x48] sm:$0xff]
          %v1785 = vld [vmem:[#allocation2 + $0x50] sm:$0xff]
          %v1786 = vld [vmem:[#allocation2 + $0x58] sm:$0xff]
          %v1787 = vld [vmem:[#allocation2 + $0x60] sm:$0xff]
          %v1788 = vld [vmem:[#allocation2 + $0x68] sm:$0xff]
          %v1789 = vld [vmem:[#allocation2 + $0x70] sm:$0xff]
          %v1790 = vld [vmem:[#allocation2 + $0x78] sm:$0xff]
          %v1791 = vld [vmem:[#allocation2 + $0x80] sm:$0xff]
          %v1792 = vld [vmem:[#allocation2 + $0x88] sm:$0xff]
          %v1793 = vld [vmem:[#allocation2 + $0x90] sm:$0xff]
          %v1794 = vld [vmem:[#allocation2 + $0x98] sm:$0xff]
          %v1795 = vld [vmem:[#allocation2 + $0xa0] sm:$0xff]
          %v1796 = vld [vmem:[#allocation2 + $0xa8] sm:$0xff]
          %v1797 = vld [vmem:[#allocation2 + $0xb0] sm:$0xff]
          %v1798 = vld [vmem:[#allocation2 + $0xb8] sm:$0xff]
          %v1799 = vld [vmem:[#allocation2 + $0xc0] sm:$0xff]
          %v1800 = vld [vmem:[#allocation2 + $0xc8] sm:$0xff]
          %v1801 = vld [vmem:[#allocation2 + $0xd0] sm:$0xff]
          %v1802 = vld [vmem:[#allocation2 + $0xd8] sm:$0xff]
          %v1803 = vld [vmem:[#allocation2 + $0xe0] sm:$0xff]
          %v1804 = vld [vmem:[#allocation2 + $0xe8] sm:$0xff]
          %v1805 = vld [vmem:[#allocation2 + $0xf0] sm:$0xff]
          %v1806 = vld [vmem:[#allocation2 + $0xf8] sm:$0xff]
          %v1807 = vld [vmem:[#allocation2 + $0x100] sm:$0xff]
          %v1808 = vld [vmem:[#allocation2 + $0x108] sm:$0xff]
          %v1809 = vld [vmem:[#allocation2 + $0x110] sm:$0xff]
          %v1810 = vld [vmem:[#allocation2 + $0x118] sm:$0xff]
          %v1811 = vld [vmem:[#allocation2 + $0x120] sm:$0xff]
          %v1812 = vld [vmem:[#allocation2 + $0x128] sm:$0xff]
          %v1813 = vld [vmem:[#allocation2 + $0x130] sm:$0xff]
          %v1814 = vld [vmem:[#allocation2 + $0x138] sm:$0xff]
          %v1815 = vld [vmem:[#allocation2 + $0x140] sm:$0xff]
          %v1816 = vld [vmem:[#allocation2 + $0x148] sm:$0xff]
          %v1817 = vld [vmem:[#allocation2 + $0x150] sm:$0xff]
          %v1818 = vld [vmem:[#allocation2 + $0x158] sm:$0xff]
          %v1819 = vld [vmem:[#allocation2 + $0x160] sm:$0xff]
          %v1820 = vld [vmem:[#allocation2 + $0x168] sm:$0xff]
          %v1821 = vld [vmem:[#allocation2 + $0x170] sm:$0xff]
          %v1822 = vld [vmem:[#allocation2 + $0x178] sm:$0xff]
          %v1823 = vld [vmem:[#allocation2 + $0x180] sm:$0xff]
          %v1824 = vld [vmem:[#allocation2 + $0x188] sm:$0xff]
          %v1825 = vld [vmem:[#allocation2 + $0x190] sm:$0xff]
          %v1826 = vld [vmem:[#allocation2 + $0x198] sm:$0xff]
          %v1827 = vld [vmem:[#allocation2 + $0x1a0] sm:$0xff]
          %v1828 = vld [vmem:[#allocation2 + $0x1a8] sm:$0xff]
          %v1829 = vld [vmem:[#allocation2 + $0x1b0] sm:$0xff]
          %v1830 = vld [vmem:[#allocation2 + $0x1b8] sm:$0xff]
          %v1831 = vld [vmem:[#allocation2 + $0x1c0] sm:$0xff]
          %v1832 = vld [vmem:[#allocation2 + $0x1c8] sm:$0xff]
          %v1833 = vld [vmem:[#allocation2 + $0x1d0] sm:$0xff]
          %v1834 = vld [vmem:[#allocation2 + $0x1d8] sm:$0xff]
          %v1835 = vld [vmem:[#allocation2 + $0x1e0] sm:$0xff]
          %v1836 = vld [vmem:[#allocation2 + $0x1e8] sm:$0xff]
          %v1837 = vld [vmem:[#allocation2 + $0x1f0] sm:$0xff]
          %v1838 = vld [vmem:[#allocation2 + $0x1f8] sm:$0xff]
          %1839 = vadd.xlane.f32.xlu0 %v1775
          %v1840 = vpop.xlane.xlu0 %1839
          %1841 = vadd.xlane.f32.xlu0 %v1776
          %v1842 = vpop.xlane.xlu0 %1841
          %1843 = vadd.xlane.f32.xlu0 %v1777
          %v1844 = vpop.xlane.xlu0 %1843
          %1845 = vadd.xlane.f32.xlu0 %v1778
          %v1846 = vpop.xlane.xlu0 %1845
          %1847 = vadd.xlane.f32.xlu0 %v1779
          %v1848 = vpop.xlane.xlu0 %1847
          %1849 = vadd.xlane.f32.xlu0 %v1780
          %v1850 = vpop.xlane.xlu0 %1849
          %1851 = vadd.xlane.f32.xlu0 %v1781
          %v1852 = vpop.xlane.xlu0 %1851
          %1853 = vadd.xlane.f32.xlu0 %v1782
          %v1854 = vpop.xlane.xlu0 %1853
          %1855 = vadd.xlane.f32.xlu0 %v1783
          %v1856 = vpop.xlane.xlu0 %1855
          %1857 = vadd.xlane.f32.xlu0 %v1784
          %v1858 = vpop.xlane.xlu0 %1857
          %1859 = vadd.xlane.f32.xlu0 %v1785
          %v1860 = vpop.xlane.xlu0 %1859
          %1861 = vadd.xlane.f32.xlu0 %v1786
          %v1862 = vpop.xlane.xlu0 %1861
          %1863 = vadd.xlane.f32.xlu0 %v1787
          %v1864 = vpop.xlane.xlu0 %1863
          %1865 = vadd.xlane.f32.xlu0 %v1788
          %v1866 = vpop.xlane.xlu0 %1865
          %1867 = vadd.xlane.f32.xlu0 %v1789
          %v1868 = vpop.xlane.xlu0 %1867
          %1869 = vadd.xlane.f32.xlu0 %v1790
          %v1870 = vpop.xlane.xlu0 %1869
          %1871 = vadd.xlane.f32.xlu0 %v1791
          %v1872 = vpop.xlane.xlu0 %1871
          %1873 = vadd.xlane.f32.xlu0 %v1792
          %v1874 = vpop.xlane.xlu0 %1873
          %1875 = vadd.xlane.f32.xlu0 %v1793
          %v1876 = vpop.xlane.xlu0 %1875
          %1877 = vadd.xlane.f32.xlu0 %v1794
          %v1878 = vpop.xlane.xlu0 %1877
          %1879 = vadd.xlane.f32.xlu0 %v1795
          %v1880 = vpop.xlane.xlu0 %1879
          %1881 = vadd.xlane.f32.xlu0 %v1796
          %v1882 = vpop.xlane.xlu0 %1881
          %1883 = vadd.xlane.f32.xlu0 %v1797
          %v1884 = vpop.xlane.xlu0 %1883
          %1885 = vadd.xlane.f32.xlu0 %v1798
          %v1886 = vpop.xlane.xlu0 %1885
          %1887 = vadd.xlane.f32.xlu0 %v1799
          %v1888 = vpop.xlane.xlu0 %1887
          %1889 = vadd.xlane.f32.xlu0 %v1800
          %v1890 = vpop.xlane.xlu0 %1889
          %1891 = vadd.xlane.f32.xlu0 %v1801
          %v1892 = vpop.xlane.xlu0 %1891
          %1893 = vadd.xlane.f32.xlu0 %v1802
          %v1894 = vpop.xlane.xlu0 %1893
          %1895 = vadd.xlane.f32.xlu0 %v1803
          %v1896 = vpop.xlane.xlu0 %1895
          %1897 = vadd.xlane.f32.xlu0 %v1804
          %v1898 = vpop.xlane.xlu0 %1897
          %1899 = vadd.xlane.f32.xlu0 %v1805
          %v1900 = vpop.xlane.xlu0 %1899
          %1901 = vadd.xlane.f32.xlu0 %v1806
          %v1902 = vpop.xlane.xlu0 %1901
          %1903 = vadd.xlane.f32.xlu0 %v1807
          %v1904 = vpop.xlane.xlu0 %1903
          %1905 = vadd.xlane.f32.xlu0 %v1808
          %v1906 = vpop.xlane.xlu0 %1905
          %1907 = vadd.xlane.f32.xlu0 %v1809
          %v1908 = vpop.xlane.xlu0 %1907
          %1909 = vadd.xlane.f32.xlu0 %v1810
          %v1910 = vpop.xlane.xlu0 %1909
          %1911 = vadd.xlane.f32.xlu0 %v1811
          %v1912 = vpop.xlane.xlu0 %1911
          %1913 = vadd.xlane.f32.xlu0 %v1812
          %v1914 = vpop.xlane.xlu0 %1913
          %1915 = vadd.xlane.f32.xlu0 %v1813
          %v1916 = vpop.xlane.xlu0 %1915
          %1917 = vadd.xlane.f32.xlu0 %v1814
          %v1918 = vpop.xlane.xlu0 %1917
          %1919 = vadd.xlane.f32.xlu0 %v1815
          %v1920 = vpop.xlane.xlu0 %1919
          %1921 = vadd.xlane.f32.xlu0 %v1816
          %v1922 = vpop.xlane.xlu0 %1921
          %1923 = vadd.xlane.f32.xlu0 %v1817
          %v1924 = vpop.xlane.xlu0 %1923
          %1925 = vadd.xlane.f32.xlu0 %v1818
          %v1926 = vpop.xlane.xlu0 %1925
          %1927 = vadd.xlane.f32.xlu0 %v1819
          %v1928 = vpop.xlane.xlu0 %1927
          %1929 = vadd.xlane.f32.xlu0 %v1820
          %v1930 = vpop.xlane.xlu0 %1929
          %1931 = vadd.xlane.f32.xlu0 %v1821
          %v1932 = vpop.xlane.xlu0 %1931
          %1933 = vadd.xlane.f32.xlu0 %v1822
          %v1934 = vpop.xlane.xlu0 %1933
          %1935 = vadd.xlane.f32.xlu0 %v1823
          %v1936 = vpop.xlane.xlu0 %1935
          %1937 = vadd.xlane.f32.xlu0 %v1824
          %v1938 = vpop.xlane.xlu0 %1937
          %1939 = vadd.xlane.f32.xlu0 %v1825
          %v1940 = vpop.xlane.xlu0 %1939
          %1941 = vadd.xlane.f32.xlu0 %v1826
          %v1942 = vpop.xlane.xlu0 %1941
          %1943 = vadd.xlane.f32.xlu0 %v1827
          %v1944 = vpop.xlane.xlu0 %1943
          %1945 = vadd.xlane.f32.xlu0 %v1828
          %v1946 = vpop.xlane.xlu0 %1945
          %1947 = vadd.xlane.f32.xlu0 %v1829
          %v1948 = vpop.xlane.xlu0 %1947
          %1949 = vadd.xlane.f32.xlu0 %v1830
          %v1950 = vpop.xlane.xlu0 %1949
          %1951 = vadd.xlane.f32.xlu0 %v1831
          %v1952 = vpop.xlane.xlu0 %1951
          %1953 = vadd.xlane.f32.xlu0 %v1832
          %v1954 = vpop.xlane.xlu0 %1953
          %1955 = vadd.xlane.f32.xlu0 %v1833
          %v1956 = vpop.xlane.xlu0 %1955
          %1957 = vadd.xlane.f32.xlu0 %v1834
          %v1958 = vpop.xlane.xlu0 %1957
          %1959 = vadd.xlane.f32.xlu0 %v1835
          %v1960 = vpop.xlane.xlu0 %1959
          %1961 = vadd.xlane.f32.xlu0 %v1836
          %v1962 = vpop.xlane.xlu0 %1961
          %1963 = vadd.xlane.f32.xlu0 %v1837
          %v1964 = vpop.xlane.xlu0 %1963
          %1965 = vadd.xlane.f32.xlu0 %v1838
          %v1966 = vpop.xlane.xlu0 %1965
          %v1967 = vmul.f32 %v1840, 0.0016666667
          %v1968 = vmul.f32 %v1842, 0.0016666667
          %v1969 = vmul.f32 %v1844, 0.0016666667
          %v1970 = vmul.f32 %v1846, 0.0016666667
          %v1971 = vmul.f32 %v1848, 0.0016666667
          %v1972 = vmul.f32 %v1850, 0.0016666667
          %v1973 = vmul.f32 %v1852, 0.0016666667
          %v1974 = vmul.f32 %v1854, 0.0016666667
          %v1975 = vmul.f32 %v1856, 0.0016666667
          %v1976 = vmul.f32 %v1858, 0.0016666667
          %v1977 = vmul.f32 %v1860, 0.0016666667
          %v1978 = vmul.f32 %v1862, 0.0016666667
          %v1979 = vmul.f32 %v1864, 0.0016666667
          %v1980 = vmul.f32 %v1866, 0.0016666667
          %v1981 = vmul.f32 %v1868, 0.0016666667
          %v1982 = vmul.f32 %v1870, 0.0016666667
          %v1983 = vmul.f32 %v1872, 0.0016666667
          %v1984 = vmul.f32 %v1874, 0.0016666667
          %v1985 = vmul.f32 %v1876, 0.0016666667
          %v1986 = vmul.f32 %v1878, 0.0016666667
          %v1987 = vmul.f32 %v1880, 0.0016666667
          %v1988 = vmul.f32 %v1882, 0.0016666667
          %v1989 = vmul.f32 %v1884, 0.0016666667
          %v1990 = vmul.f32 %v1886, 0.0016666667
          %v1991 = vmul.f32 %v1888, 0.0016666667
          %v1992 = vmul.f32 %v1890, 0.0016666667
          %v1993 = vmul.f32 %v1892, 0.0016666667
          %v1994 = vmul.f32 %v1894, 0.0016666667
          %v1995 = vmul.f32 %v1896, 0.0016666667
          %v1996 = vmul.f32 %v1898, 0.0016666667
          %v1997 = vmul.f32 %v1900, 0.0016666667
          %v1998 = vmul.f32 %v1902, 0.0016666667
          %v1999 = vmul.f32 %v1904, 0.0016666667
          %v2000 = vmul.f32 %v1906, 0.0016666667
          %v2001 = vmul.f32 %v1908, 0.0016666667
          %v2002 = vmul.f32 %v1910, 0.0016666667
          %v2003 = vmul.f32 %v1912, 0.0016666667
          %v2004 = vmul.f32 %v1914, 0.0016666667
          %v2005 = vmul.f32 %v1916, 0.0016666667
          %v2006 = vmul.f32 %v1918, 0.0016666667
          %v2007 = vmul.f32 %v1920, 0.0016666667
          %v2008 = vmul.f32 %v1922, 0.0016666667
          %v2009 = vmul.f32 %v1924, 0.0016666667
          %v2010 = vmul.f32 %v1926, 0.0016666667
          %v2011 = vmul.f32 %v1928, 0.0016666667
          %v2012 = vmul.f32 %v1930, 0.0016666667
          %v2013 = vmul.f32 %v1932, 0.0016666667
          %v2014 = vmul.f32 %v1934, 0.0016666667
          %v2015 = vmul.f32 %v1936, 0.0016666667
          %v2016 = vmul.f32 %v1938, 0.0016666667
          %v2017 = vmul.f32 %v1940, 0.0016666667
          %v2018 = vmul.f32 %v1942, 0.0016666667
          %v2019 = vmul.f32 %v1944, 0.0016666667
          %v2020 = vmul.f32 %v1946, 0.0016666667
          %v2021 = vmul.f32 %v1948, 0.0016666667
          %v2022 = vmul.f32 %v1950, 0.0016666667
          %v2023 = vmul.f32 %v1952, 0.0016666667
          %v2024 = vmul.f32 %v1954, 0.0016666667
          %v2025 = vmul.f32 %v1956, 0.0016666667
          %v2026 = vmul.f32 %v1958, 0.0016666667
          %v2027 = vmul.f32 %v1960, 0.0016666667
          %v2028 = vmul.f32 %v1962, 0.0016666667
          %v2029 = vmul.f32 %v1964, 0.0016666667
          %v2030 = vmul.f32 %v1966, 0.0016666667
          %v2031 = vld [vmem:[%s1] sm:$0xff]
          %v2032 = vld [vmem:[%s1 + $0x8] sm:$0xff]
          %v2033 = vld [vmem:[%s1 + $0x10] sm:$0xff]
          %v2034 = vld [vmem:[%s1 + $0x18] sm:$0xff]
          %v2035 = vld [vmem:[%s1 + $0x20] sm:$0xff]
          %v2036 = vld [vmem:[%s1 + $0x28] sm:$0xff]
          %v2037 = vld [vmem:[%s1 + $0x30] sm:$0xff]
          %v2038 = vld [vmem:[%s1 + $0x38] sm:$0xff]
          %v2039 = vld [vmem:[%s1 + $0x40] sm:$0xff]
          %v2040 = vld [vmem:[%s1 + $0x48] sm:$0xff]
          %v2041 = vld [vmem:[%s1 + $0x50] sm:$0xff]
          %v2042 = vld [vmem:[%s1 + $0x58] sm:$0xff]
          %v2043 = vld [vmem:[%s1 + $0x60] sm:$0xff]
          %v2044 = vld [vmem:[%s1 + $0x68] sm:$0xff]
          %v2045 = vld [vmem:[%s1 + $0x70] sm:$0xff]
          %v2046 = vld [vmem:[%s1 + $0x78] sm:$0xff]
          %v2047 = vld [vmem:[%s1 + $0x80] sm:$0xff]
          %v2048 = vld [vmem:[%s1 + $0x88] sm:$0xff]
          %v2049 = vld [vmem:[%s1 + $0x90] sm:$0xff]
          %v2050 = vld [vmem:[%s1 + $0x98] sm:$0xff]
          %v2051 = vld [vmem:[%s1 + $0xa0] sm:$0xff]
          %v2052 = vld [vmem:[%s1 + $0xa8] sm:$0xff]
          %v2053 = vld [vmem:[%s1 + $0xb0] sm:$0xff]
          %v2054 = vld [vmem:[%s1 + $0xb8] sm:$0xff]
          %v2055 = vld [vmem:[%s1 + $0xc0] sm:$0xff]
          %v2056 = vld [vmem:[%s1 + $0xc8] sm:$0xff]
          %v2057 = vld [vmem:[%s1 + $0xd0] sm:$0xff]
          %v2058 = vld [vmem:[%s1 + $0xd8] sm:$0xff]
          %v2059 = vld [vmem:[%s1 + $0xe0] sm:$0xff]
          %v2060 = vld [vmem:[%s1 + $0xe8] sm:$0xff]
          %v2061 = vld [vmem:[%s1 + $0xf0] sm:$0xff]
          %v2062 = vld [vmem:[%s1 + $0xf8] sm:$0xff]
          %v2063 = vld [vmem:[%s2] sm:$0x1]
          %v2065 = vlaneseq
          %v2066 = vshrl.u32 %v2065, 7
          %v2067 = vsub.s32 0, %v2066
          %v2068 = vrot.slane %v2063, %v2067
          %v2134 = vlaneseq
          %v2135 = vshrl.u32 %v2134, 7
          %v2136 = vsub.s32 %v1120, %v2135
          %v2137 = vrot.slane %v1967, %v2136
          %v2138 = vadd.s32 %v1120, 4294967288
          %v2139 = vlaneseq
          %v2140 = vshrl.u32 %v2139, 7
          %v2141 = vsub.s32 %v2138, %v2140
          %v2142 = vrot.slane %v1968, %v2141
          %vm2143 = vcmask 130112
          %v2144 = vsel %vm2143, %v2142, %v2137
          %v2145 = vadd.s32 %v1120, 4294967280
          %v2146 = vlaneseq
          %v2147 = vshrl.u32 %v2146, 7
          %v2148 = vsub.s32 %v2145, %v2147
          %v2149 = vrot.slane %v1969, %v2148
          %vm2150 = vcmask 195712
          %v2151 = vsel %vm2150, %v2149, %v2144
          %v2152 = vadd.s32 %v1120, 4294967272
          %v2153 = vlaneseq
          %v2154 = vshrl.u32 %v2153, 7
          %v2155 = vsub.s32 %v2152, %v2154
          %v2156 = vrot.slane %v1970, %v2155
          %vm2157 = vcmask 261312
          %v2158 = vsel %vm2157, %v2156, %v2151
          %v2159 = vadd.s32 %v1120, 4294967264
          %v2160 = vlaneseq
          %v2161 = vshrl.u32 %v2160, 7
          %v2162 = vsub.s32 %v2159, %v2161
          %v2163 = vrot.slane %v1971, %v2162
          %vm2164 = vcmask 326912
          %v2165 = vsel %vm2164, %v2163, %v2158
          %v2166 = vadd.s32 %v1120, 4294967256
          %v2167 = vlaneseq
          %v2168 = vshrl.u32 %v2167, 7
          %v2169 = vsub.s32 %v2166, %v2168
          %v2170 = vrot.slane %v1972, %v2169
          %vm2171 = vcmask 392512
          %v2172 = vsel %vm2171, %v2170, %v2165
          %v2173 = vadd.s32 %v1120, 4294967248
          %v2174 = vlaneseq
          %v2175 = vshrl.u32 %v2174, 7
          %v2176 = vsub.s32 %v2173, %v2175
          %v2177 = vrot.slane %v1973, %v2176
          %vm2178 = vcmask 458112
          %v2179 = vsel %vm2178, %v2177, %v2172
          %v2180 = vadd.s32 %v1120, 4294967240
          %v2181 = vlaneseq
          %v2182 = vshrl.u32 %v2181, 7
          %v2183 = vsub.s32 %v2180, %v2182
          %v2184 = vrot.slane %v1974, %v2183
          %vm2185 = vcmask 523712
          %v2186 = vsel %vm2185, %v2184, %v2179
          %v2187 = vadd.s32 %v1120, 4294967232
          %v2188 = vlaneseq
          %v2189 = vshrl.u32 %v2188, 7
          %v2190 = vsub.s32 %v2187, %v2189
          %v2191 = vrot.slane %v1975, %v2190
          %vm2192 = vcmask 589312
          %v2193 = vsel %vm2192, %v2191, %v2186
          %v2194 = vadd.s32 %v1120, 4294967224
          %v2195 = vlaneseq
          %v2196 = vshrl.u32 %v2195, 7
          %v2197 = vsub.s32 %v2194, %v2196
          %v2198 = vrot.slane %v1976, %v2197
          %vm2199 = vcmask 654912
          %v2200 = vsel %vm2199, %v2198, %v2193
          %v2201 = vadd.s32 %v1120, 4294967216
          %v2202 = vlaneseq
          %v2203 = vshrl.u32 %v2202, 7
          %v2204 = vsub.s32 %v2201, %v2203
          %v2205 = vrot.slane %v1977, %v2204
          %vm2206 = vcmask 720512
          %v2207 = vsel %vm2206, %v2205, %v2200
          %v2208 = vadd.s32 %v1120, 4294967208
          %v2209 = vlaneseq
          %v2210 = vshrl.u32 %v2209, 7
          %v2211 = vsub.s32 %v2208, %v2210
          %v2212 = vrot.slane %v1978, %v2211
          %vm2213 = vcmask 786112
          %v2214 = vsel %vm2213, %v2212, %v2207
          %v2215 = vadd.s32 %v1120, 4294967200
          %v2216 = vlaneseq
          %v2217 = vshrl.u32 %v2216, 7
          %v2218 = vsub.s32 %v2215, %v2217
          %v2219 = vrot.slane %v1979, %v2218
          %vm2220 = vcmask 851712
          %v2221 = vsel %vm2220, %v2219, %v2214
          %v2222 = vadd.s32 %v1120, 4294967192
          %v2223 = vlaneseq
          %v2224 = vshrl.u32 %v2223, 7
          %v2225 = vsub.s32 %v2222, %v2224
          %v2226 = vrot.slane %v1980, %v2225
          %vm2227 = vcmask 917312
          %v2228 = vsel %vm2227, %v2226, %v2221
          %v2229 = vadd.s32 %v1120, 4294967184
          %v2230 = vlaneseq
          %v2231 = vshrl.u32 %v2230, 7
          %v2232 = vsub.s32 %v2229, %v2231
          %v2233 = vrot.slane %v1981, %v2232
          %vm2234 = vcmask 982912
          %v2235 = vsel %vm2234, %v2233, %v2228
          %v2236 = vadd.s32 %v1120, 4294967176
          %v2237 = vlaneseq
          %v2238 = vshrl.u32 %v2237, 7
          %v2239 = vsub.s32 %v2236, %v2238
          %v2240 = vrot.slane %v1982, %v2239
          %vm2241 = vcmask 1048512
          %v2242 = vsel %vm2241, %v2240, %v2235
          %v2243 = vlaneseq
          %v2244 = vshrl.u32 %v2243, 7
          %v2245 = vsub.s32 %v1120, %v2244
          %v2246 = vrot.slane %v1983, %v2245
          %v2247 = vlaneseq
          %v2248 = vshrl.u32 %v2247, 7
          %v2249 = vsub.s32 %v2138, %v2248
          %v2250 = vrot.slane %v1984, %v2249
          %v2251 = vsel %vm2143, %v2250, %v2246
          %v2252 = vlaneseq
          %v2253 = vshrl.u32 %v2252, 7
          %v2254 = vsub.s32 %v2145, %v2253
          %v2255 = vrot.slane %v1985, %v2254
          %v2256 = vsel %vm2150, %v2255, %v2251
          %v2257 = vlaneseq
          %v2258 = vshrl.u32 %v2257, 7
          %v2259 = vsub.s32 %v2152, %v2258
          %v2260 = vrot.slane %v1986, %v2259
          %v2261 = vsel %vm2157, %v2260, %v2256
          %v2262 = vlaneseq
          %v2263 = vshrl.u32 %v2262, 7
          %v2264 = vsub.s32 %v2159, %v2263
          %v2265 = vrot.slane %v1987, %v2264
          %v2266 = vsel %vm2164, %v2265, %v2261
          %v2267 = vlaneseq
          %v2268 = vshrl.u32 %v2267, 7
          %v2269 = vsub.s32 %v2166, %v2268
          %v2270 = vrot.slane %v1988, %v2269
          %v2271 = vsel %vm2171, %v2270, %v2266
          %v2272 = vlaneseq
          %v2273 = vshrl.u32 %v2272, 7
          %v2274 = vsub.s32 %v2173, %v2273
          %v2275 = vrot.slane %v1989, %v2274
          %v2276 = vsel %vm2178, %v2275, %v2271
          %v2277 = vlaneseq
          %v2278 = vshrl.u32 %v2277, 7
          %v2279 = vsub.s32 %v2180, %v2278
          %v2280 = vrot.slane %v1990, %v2279
          %v2281 = vsel %vm2185, %v2280, %v2276
          %v2282 = vlaneseq
          %v2283 = vshrl.u32 %v2282, 7
          %v2284 = vsub.s32 %v2187, %v2283
          %v2285 = vrot.slane %v1991, %v2284
          %v2286 = vsel %vm2192, %v2285, %v2281
          %v2287 = vlaneseq
          %v2288 = vshrl.u32 %v2287, 7
          %v2289 = vsub.s32 %v2194, %v2288
          %v2290 = vrot.slane %v1992, %v2289
          %v2291 = vsel %vm2199, %v2290, %v2286
          %v2292 = vlaneseq
          %v2293 = vshrl.u32 %v2292, 7
          %v2294 = vsub.s32 %v2201, %v2293
          %v2295 = vrot.slane %v1993, %v2294
          %v2296 = vsel %vm2206, %v2295, %v2291
          %v2297 = vlaneseq
          %v2298 = vshrl.u32 %v2297, 7
          %v2299 = vsub.s32 %v2208, %v2298
          %v2300 = vrot.slane %v1994, %v2299
          %v2301 = vsel %vm2213, %v2300, %v2296
          %v2302 = vlaneseq
          %v2303 = vshrl.u32 %v2302, 7
          %v2304 = vsub.s32 %v2215, %v2303
          %v2305 = vrot.slane %v1995, %v2304
          %v2306 = vsel %vm2220, %v2305, %v2301
          %v2307 = vlaneseq
          %v2308 = vshrl.u32 %v2307, 7
          %v2309 = vsub.s32 %v2222, %v2308
          %v2310 = vrot.slane %v1996, %v2309
          %v2311 = vsel %vm2227, %v2310, %v2306
          %v2312 = vlaneseq
          %v2313 = vshrl.u32 %v2312, 7
          %v2314 = vsub.s32 %v2229, %v2313
          %v2315 = vrot.slane %v1997, %v2314
          %v2316 = vsel %vm2234, %v2315, %v2311
          %v2317 = vlaneseq
          %v2318 = vshrl.u32 %v2317, 7
          %v2319 = vsub.s32 %v2236, %v2318
          %v2320 = vrot.slane %v1998, %v2319
          %v2321 = vsel %vm2241, %v2320, %v2316
          %v2322 = vlaneseq
          %v2323 = vshrl.u32 %v2322, 7
          %v2324 = vsub.s32 %v1120, %v2323
          %v2325 = vrot.slane %v1999, %v2324
          %v2326 = vlaneseq
          %v2327 = vshrl.u32 %v2326, 7
          %v2328 = vsub.s32 %v2138, %v2327
          %v2329 = vrot.slane %v2000, %v2328
          %v2330 = vsel %vm2143, %v2329, %v2325
          %v2331 = vlaneseq
          %v2332 = vshrl.u32 %v2331, 7
          %v2333 = vsub.s32 %v2145, %v2332
          %v2334 = vrot.slane %v2001, %v2333
          %v2335 = vsel %vm2150, %v2334, %v2330
          %v2336 = vlaneseq
          %v2337 = vshrl.u32 %v2336, 7
          %v2338 = vsub.s32 %v2152, %v2337
          %v2339 = vrot.slane %v2002, %v2338
          %v2340 = vsel %vm2157, %v2339, %v2335
          %v2341 = vlaneseq
          %v2342 = vshrl.u32 %v2341, 7
          %v2343 = vsub.s32 %v2159, %v2342
          %v2344 = vrot.slane %v2003, %v2343
          %v2345 = vsel %vm2164, %v2344, %v2340
          %v2346 = vlaneseq
          %v2347 = vshrl.u32 %v2346, 7
          %v2348 = vsub.s32 %v2166, %v2347
          %v2349 = vrot.slane %v2004, %v2348
          %v2350 = vsel %vm2171, %v2349, %v2345
          %v2351 = vlaneseq
          %v2352 = vshrl.u32 %v2351, 7
          %v2353 = vsub.s32 %v2173, %v2352
          %v2354 = vrot.slane %v2005, %v2353
          %v2355 = vsel %vm2178, %v2354, %v2350
          %v2356 = vlaneseq
          %v2357 = vshrl.u32 %v2356, 7
          %v2358 = vsub.s32 %v2180, %v2357
          %v2359 = vrot.slane %v2006, %v2358
          %v2360 = vsel %vm2185, %v2359, %v2355
          %v2361 = vlaneseq
          %v2362 = vshrl.u32 %v2361, 7
          %v2363 = vsub.s32 %v2187, %v2362
          %v2364 = vrot.slane %v2007, %v2363
          %v2365 = vsel %vm2192, %v2364, %v2360
          %v2366 = vlaneseq
          %v2367 = vshrl.u32 %v2366, 7
          %v2368 = vsub.s32 %v2194, %v2367
          %v2369 = vrot.slane %v2008, %v2368
          %v2370 = vsel %vm2199, %v2369, %v2365
          %v2371 = vlaneseq
          %v2372 = vshrl.u32 %v2371, 7
          %v2373 = vsub.s32 %v2201, %v2372
          %v2374 = vrot.slane %v2009, %v2373
          %v2375 = vsel %vm2206, %v2374, %v2370
          %v2376 = vlaneseq
          %v2377 = vshrl.u32 %v2376, 7
          %v2378 = vsub.s32 %v2208, %v2377
          %v2379 = vrot.slane %v2010, %v2378
          %v2380 = vsel %vm2213, %v2379, %v2375
          %v2381 = vlaneseq
          %v2382 = vshrl.u32 %v2381, 7
          %v2383 = vsub.s32 %v2215, %v2382
          %v2384 = vrot.slane %v2011, %v2383
          %v2385 = vsel %vm2220, %v2384, %v2380
          %v2386 = vlaneseq
          %v2387 = vshrl.u32 %v2386, 7
          %v2388 = vsub.s32 %v2222, %v2387
          %v2389 = vrot.slane %v2012, %v2388
          %v2390 = vsel %vm2227, %v2389, %v2385
          %v2391 = vlaneseq
          %v2392 = vshrl.u32 %v2391, 7
          %v2393 = vsub.s32 %v2229, %v2392
          %v2394 = vrot.slane %v2013, %v2393
          %v2395 = vsel %vm2234, %v2394, %v2390
          %v2396 = vlaneseq
          %v2397 = vshrl.u32 %v2396, 7
          %v2398 = vsub.s32 %v2236, %v2397
          %v2399 = vrot.slane %v2014, %v2398
          %v2400 = vsel %vm2241, %v2399, %v2395
          %v2401 = vlaneseq
          %v2402 = vshrl.u32 %v2401, 7
          %v2403 = vsub.s32 %v1120, %v2402
          %v2404 = vrot.slane %v2015, %v2403
          %v2405 = vlaneseq
          %v2406 = vshrl.u32 %v2405, 7
          %v2407 = vsub.s32 %v2138, %v2406
          %v2408 = vrot.slane %v2016, %v2407
          %v2409 = vsel %vm2143, %v2408, %v2404
          %v2410 = vlaneseq
          %v2411 = vshrl.u32 %v2410, 7
          %v2412 = vsub.s32 %v2145, %v2411
          %v2413 = vrot.slane %v2017, %v2412
          %v2414 = vsel %vm2150, %v2413, %v2409
          %v2415 = vlaneseq
          %v2416 = vshrl.u32 %v2415, 7
          %v2417 = vsub.s32 %v2152, %v2416
          %v2418 = vrot.slane %v2018, %v2417
          %v2419 = vsel %vm2157, %v2418, %v2414
          %v2420 = vlaneseq
          %v2421 = vshrl.u32 %v2420, 7
          %v2422 = vsub.s32 %v2159, %v2421
          %v2423 = vrot.slane %v2019, %v2422
          %v2424 = vsel %vm2164, %v2423, %v2419
          %v2425 = vlaneseq
          %v2426 = vshrl.u32 %v2425, 7
          %v2427 = vsub.s32 %v2166, %v2426
          %v2428 = vrot.slane %v2020, %v2427
          %v2429 = vsel %vm2171, %v2428, %v2424
          %v2430 = vlaneseq
          %v2431 = vshrl.u32 %v2430, 7
          %v2432 = vsub.s32 %v2173, %v2431
          %v2433 = vrot.slane %v2021, %v2432
          %v2434 = vsel %vm2178, %v2433, %v2429
          %v2435 = vlaneseq
          %v2436 = vshrl.u32 %v2435, 7
          %v2437 = vsub.s32 %v2180, %v2436
          %v2438 = vrot.slane %v2022, %v2437
          %v2439 = vsel %vm2185, %v2438, %v2434
          %v2440 = vlaneseq
          %v2441 = vshrl.u32 %v2440, 7
          %v2442 = vsub.s32 %v2187, %v2441
          %v2443 = vrot.slane %v2023, %v2442
          %v2444 = vsel %vm2192, %v2443, %v2439
          %v2445 = vlaneseq
          %v2446 = vshrl.u32 %v2445, 7
          %v2447 = vsub.s32 %v2194, %v2446
          %v2448 = vrot.slane %v2024, %v2447
          %v2449 = vsel %vm2199, %v2448, %v2444
          %v2450 = vlaneseq
          %v2451 = vshrl.u32 %v2450, 7
          %v2452 = vsub.s32 %v2201, %v2451
          %v2453 = vrot.slane %v2025, %v2452
          %v2454 = vsel %vm2206, %v2453, %v2449
          %v2455 = vlaneseq
          %v2456 = vshrl.u32 %v2455, 7
          %v2457 = vsub.s32 %v2208, %v2456
          %v2458 = vrot.slane %v2026, %v2457
          %v2459 = vsel %vm2213, %v2458, %v2454
          %v2460 = vlaneseq
          %v2461 = vshrl.u32 %v2460, 7
          %v2462 = vsub.s32 %v2215, %v2461
          %v2463 = vrot.slane %v2027, %v2462
          %v2464 = vsel %vm2220, %v2463, %v2459
          %v2465 = vlaneseq
          %v2466 = vshrl.u32 %v2465, 7
          %v2467 = vsub.s32 %v2222, %v2466
          %v2468 = vrot.slane %v2028, %v2467
          %v2469 = vsel %vm2227, %v2468, %v2464
          %v2470 = vlaneseq
          %v2471 = vshrl.u32 %v2470, 7
          %v2472 = vsub.s32 %v2229, %v2471
          %v2473 = vrot.slane %v2029, %v2472
          %v2474 = vsel %vm2234, %v2473, %v2469
          %v2475 = vlaneseq
          %v2476 = vshrl.u32 %v2475, 7
          %v2477 = vsub.s32 %v2236, %v2476
          %v2478 = vrot.slane %v2030, %v2477
          %v2479 = vsel %vm2241, %v2478, %v2474
          %vm2480 = vcmask 1041409
          %v2481 = vsel %vm2480, %v2400, %v2242
          %v2482 = vsel %vm2480, %v2479, %v2321
          %2485 = vmatprep.subr.mxu0 0.0
          %2486 = vmatpush1.msra.mxu0 %v2046
          %2487 = vmatprep.subr.mxu0 0.0
          %2488 = vmatpush1.msra.mxu0 %v2045
          %2489 = vmatprep.subr.mxu0 0.0
          %2490 = vmatpush1.msra.mxu0 %v2044
          %2491 = vmatprep.subr.mxu0 0.0
          %2492 = vmatpush1.msra.mxu0 %v2043
          %2493 = vmatprep.subr.mxu0 0.0
          %2494 = vmatpush1.msra.mxu0 %v2042
          %2495 = vmatprep.subr.mxu0 0.0
          %2496 = vmatpush1.msra.mxu0 %v2041
          %2497 = vmatprep.subr.mxu0 0.0
          %2498 = vmatpush1.msra.mxu0 %v2040
          %2499 = vmatprep.subr.mxu0 0.0
          %2500 = vmatpush1.msra.mxu0 %v2039
          %2501 = vmatprep.subr.mxu0 0.0
          %2502 = vmatpush1.msra.mxu0 %v2038
          %2503 = vmatprep.subr.mxu0 0.0
          %2504 = vmatpush1.msra.mxu0 %v2037
          %2505 = vmatprep.subr.mxu0 0.0
          %2506 = vmatpush1.msra.mxu0 %v2036
          %2507 = vmatprep.subr.mxu0 0.0
          %2508 = vmatpush1.msra.mxu0 %v2035
          %2509 = vmatprep.subr.mxu0 0.0
          %2510 = vmatpush1.msra.mxu0 %v2034
          %2511 = vmatprep.subr.mxu0 0.0
          %2512 = vmatpush1.msra.mxu0 %v2033
          %2513 = vmatprep.subr.mxu0 0.0
          %2514 = vmatpush1.msra.mxu0 %v2032
          %2515 = vmatprep.subr.mxu0 0.0
          %2516 = vmatpush1.msra.mxu0 %v2031
          %2517 = vmatprep.subr.mxu0 0.0
          %2518 = vmatpush2.msra.mxu0 %v2062
          %2519 = vmatprep.subr.mxu0 0.0
          %2520 = vmatpush2.msra.mxu0 %v2061
          %2521 = vmatprep.subr.mxu0 0.0
          %2522 = vmatpush2.msra.mxu0 %v2060
          %2523 = vmatprep.subr.mxu0 0.0
          %2524 = vmatpush2.msra.mxu0 %v2059
          %2525 = vmatprep.subr.mxu0 0.0
          %2526 = vmatpush2.msra.mxu0 %v2058
          %2527 = vmatprep.subr.mxu0 0.0
          %2528 = vmatpush2.msra.mxu0 %v2057
          %2529 = vmatprep.subr.mxu0 0.0
          %2530 = vmatpush2.msra.mxu0 %v2056
          %2531 = vmatprep.subr.mxu0 0.0
          %2532 = vmatpush2.msra.mxu0 %v2055
          %2533 = vmatprep.subr.mxu0 0.0
          %2534 = vmatpush2.msra.mxu0 %v2054
          %2535 = vmatprep.subr.mxu0 0.0
          %2536 = vmatpush2.msra.mxu0 %v2053
          %2537 = vmatprep.subr.mxu0 0.0
          %2538 = vmatpush2.msra.mxu0 %v2052
          %2539 = vmatprep.subr.mxu0 0.0
          %2540 = vmatpush2.msra.mxu0 %v2051
          %2541 = vmatprep.subr.mxu0 0.0
          %2542 = vmatpush2.msra.mxu0 %v2050
          %2543 = vmatprep.subr.mxu0 0.0
          %2544 = vmatpush2.msra.mxu0 %v2049
          %2545 = vmatprep.subr.mxu0 0.0
          %2546 = vmatpush2.msra.mxu0 %v2048
          %2547 = vmatprep.subr.mxu0 0.0
          %2548 = vmatpush2.msra.mxu0 %v2047
          %2549 = vmatprep.mubr.f32.mxu0 %v2482
          %2550 = vmatmul.mubr.f32.gmra.mxu0 %v2481
          %v2551 = vpop.f32.mrf.mxu0
          %v2552 = vadd.f32 %v2068, %v2551
          %v2553 = vpop.f32.mrf.mxu0
          %2554 = vdwg.mxu0
          %v2555 = vmul.f32 %v2552, %v2552
          %vm2556 = vcmask 1041408
          %v2557 = vsel %vm2556, %v2555, 0.0
          %2558 = vadd.xlane.f32.xlu0 %v2557
          %v2559 = vpop.xlane.xlu0 %2558
          %v2560 = vmax.f32 %v2559, 1e-24
          %v2561 = vrsqrt.pop %v2560
          %v2562 = vmul.f32 %v2552, %v2561
          %2563 = vst [vmem:[%s788] sm:$0x3] %v2562
        $region92: #{_proj_head_single.1} parent=79 // pred_fallthru
          _
        %s2564 = sand.u32 %s107, 1
        %s2565 = scalar_lea.sflag [#allocation5], %s2564
        %s2566 = sand.u32 %s107, 1
        %s2567 = smul.addr %s2566, 2
        %s2568 = scalar_lea.vmem [#allocation4], %s2567
        // Predicated region
        $region93: #{_proj_head_single.1} parent=79 // pred_check
          %p2569 = pneg %p117
        $region94: #{_proj_head_single.1} parent=79 // pred_check_branch
          %2571 = sbr.rel (%p2569) target = $region96
        $region95: #{_proj_head_single.1} parent=79 // pred_region
          %s2573 = ssub.s32 32, 32
          %2574 = vsyncadd %s2565, %s2573
          %s2575 = smul.addr %s21, 32
          %s2576 = scalar_lea.hbm %s3, %s2575
          %s2578 = sshll.u32 %s2568, 4
          %s2579 = int_to_ptr.vmem [resolvable:$true] %s2578
          %2581 = dma.vmem_to_hbm [thread:$0]  %s2579, 32, %s2576, %s2565
        $region96: #{_proj_head_single.1} parent=79 // pred_fallthru
          _
      $region80: #{_proj_head_single.1} parent=5 // pred_fallthru
        _
      %p2582 = scmp.le.s32.totalorder 2, %s12
      // Predicated region
      $region97: #{_proj_head_single.1} parent=5 // pred_check
        %p2583 = pneg %p2582
      $region98: #{_proj_head_single.1} parent=5 // pred_check_branch
        %2585 = sbr.rel (%p2583) target = $region100
      $region99: #{_proj_head_single.1} parent=5 // pred_region
        %s2586 = ssub.s32 %s12, 2
        // Predicated region
        $region101: #{_proj_head_single.1} parent=99 // pred_check
          %p2587 = pneg %p123
        $region102: #{_proj_head_single.1} parent=99 // pred_check_branch
          %2589 = sbr.rel (%p2587) target = $region104
        $region103: #{_proj_head_single.1} parent=99 // pred_region
          %s2590 = sand.u32 %s108, 1
          %s2591 = scalar_lea.sflag [#allocation5], %s2590
          %s2592 = sand.u32 %s108, 1
          %s2593 = smul.addr %s2592, 2
          %s2594 = scalar_lea.vmem [#allocation4], %s2593
          %2595 = dma.done %s2591, 32
        $region104: #{_proj_head_single.1} parent=99 // pred_fallthru
          _
      $region100: #{_proj_head_single.1} parent=5 // pred_fallthru
        _
    $region6: #{_proj_head_single.1} parent=1 // loop_footer
      %s16 = sadd.s32 1, %s12
    $region7: #{_proj_head_single.1} parent=1 // loop_footer_branch
      %11 = sbr.rel target = $region3
    $region8: #{_proj_head_single.1} parent=1 // loop_exit
      _
    %2596 = vsyncpa [#allocation5], 1
    %s2597 = scalar_lea.sflag [#allocation5], 1
    %2598 = vsyncpa %s2597, 1

</llo_original>
